<compile_context>
chip_gen: v5e
topology: v5e:2x2
jax: 0.10.0
libtpu: 0.0.40
codegen_flags: <defaults>
</compile_context>

<pallas_src>
import functools

import jax
import jax.numpy as jnp
import numpy as np
from jax.experimental import pallas as pl
from jax.experimental.pallas import tpu as pltpu

D = 64
OUTPUT_NC = 3

# ConvTranspose2d(k=4, s=2, p=1) tap tables.  For output parity p (0=even, 1=odd), _TAPS[p]
# lists (offset into the 1-padded input, kernel index k), derived from  o = 2*i + k - 1.
_TAPS = (((0, 3), (1, 1)),   # even output rows / cols
         ((1, 2), (2, 0)))   # odd  output rows / cols

# Regrouped by padded-input offset: _OFF_TAPS[off] = ((parity, k), ...).  Each of the 9
# distinct shifted input views is materialised once and reused by every matmul that needs it.
_OFF_TAPS = (
    ((0, 3),),            # offset 0: even parity, k = 3
    ((0, 1), (1, 2)),     # offset 1: even parity k = 1, odd parity k = 2
    ((1, 0),),            # offset 2: odd parity, k = 0
)


# --------------------------------------------------------------------------------------
# Kernel 1: fused ReLU + concat + pad + ConvTranspose2d(Cin, Cout, 4, 2, 1, bias=False)
# --------------------------------------------------------------------------------------
def _deconv_body(x_refs, w_ref, out_ref, xp_ref, apply_tanh):
    # x_refs : 1 or 2 full (N, H, W, Ck) inputs (conceptually concatenated along C)
    # w_ref  : (1, 4, 4, Cin, cb) bf16 weight block;  w[., kh, kw, ci, co] = W_pt[ci, co, kh, kw]
    # out_ref: (N, 4, hb, W, cb)  parity quarter q = dy*2+dx holds output pixels (2i+dy, 2j+dx)
    # xp_ref : (N, H+2, W+2, Cin) bf16 scratch: relu(concat(x)) with a 1-pixel zero border
    N, _, hb, W, cb = out_ref.shape
    Cin = xp_ref.shape[-1]
    H = x_refs[0].shape[1]
    nh = H // hb
    M = N * hb * W

    hi = pl.program_id(1)
    h0 = hi * hb

    # ---- fill the (hb+2)-row padded window [h0, h0+hb+2) that this step reads -------------
    # (written unconditionally per step -> no cross-step dependency -> row axis is 'parallel')
    zrow = jnp.zeros((N, 1, W + 2, Cin), xp_ref.dtype)

    @pl.when(hi == 0)
    def _():
        xp_ref[:, 0:1, :, :] = zrow                        # top zero-padding row

    @pl.when(hi == nh - 1)
    def _():
        xp_ref[:, H + 1:H + 2, :, :] = zrow                # bottom zero-padding row

    zcol = jnp.zeros((N, hb + 2, 1, Cin), xp_ref.dtype)
    xp_ref[:, pl.ds(h0, hb + 2), 0:1, :] = zcol            # left zero-padding column
    xp_ref[:, pl.ds(h0, hb + 2), W + 1:W + 2, :] = zcol    # right zero-padding column

    c0 = 0
    for xr in x_refs:                                      # fused relu + concat + bf16 cast
        c = xr.shape[-1]
        xp_ref[:, pl.ds(h0 + 1, hb), 1:W + 1, c0:c0 + c] = (
            jnp.maximum(xr[:, pl.ds(h0, hb), :, :], 0.0).astype(xp_ref.dtype))
        if nh > 1:
            @pl.when(hi > 0)                               # halo row above this block
            def _():
                xp_ref[:, pl.ds(h0, 1), 1:W + 1, c0:c0 + c] = (
                    jnp.maximum(xr[:, pl.ds(h0 - 1, 1), :, :], 0.0).astype(xp_ref.dtype))

            @pl.when(hi < nh - 1)                          # halo row below this block
            def _():
                xp_ref[:, pl.ds(h0 + hb + 1, 1), 1:W + 1, c0:c0 + c] = (
                    jnp.maximum(xr[:, pl.ds(h0 + hb, 1), :, :], 0.0).astype(xp_ref.dtype))
        c0 += c

    # ---- 9 shifted views -> 16 MXU matmuls into 4 parity accumulators ---------------------
    accs = [jnp.zeros((M, cb), jnp.float32) for _ in range(4)]
    for oy in range(3):
        for ox in range(3):
            xs = xp_ref[:, pl.ds(h0 + oy, hb), ox:ox + W, :].reshape(M, Cin)
            for dy, kh in _OFF_TAPS[oy]:
                for dx, kw in _OFF_TAPS[ox]:
                    q = dy * 2 + dx
                    accs[q] = accs[q] + jnp.dot(xs, w_ref[0, kh, kw],
                                                preferred_element_type=jnp.float32)

    for dy in range(2):
        for dx in range(2):
            v = accs[dy * 2 + dx]
            if apply_tanh:
                v = jnp.tanh(v)
            out_ref[:, dy * 2 + dx, :, :, :] = v.reshape(N, hb, W, cb).astype(out_ref.dtype)


def _deconv_kernel1(x1_ref, w_ref, out_ref, xp_ref, *, apply_tanh):
    _deconv_body((x1_ref,), w_ref, out_ref, xp_ref, apply_tanh)


def _deconv_kernel2(x1_ref, x2_ref, w_ref, out_ref, xp_ref, *, apply_tanh):
    _deconv_body((x1_ref, x2_ref), w_ref, out_ref, xp_ref, apply_tanh)


def _tpu_generation():
    try:
        kind = jax.devices()[0].device_kind.lower()
    except Exception:
        return 0
    if "tpu" not in kind:
        return 0
    for g in (7, 6, 5, 4):
        if ("v%d" % g) in kind or ("tpu%d" % g) in kind:
            return g
    return 0


def _pick_cb(cout):
    """Cout block width: lane-dense and sized so the double-buffered weight block fits the
    default scoped VMEM on every generation (256 on v6e/v7x, 128 on v5e / unknown)."""
    if cout < 128:
        return cout
    if cout % 256 == 0 and _tpu_generation() >= 6:
        return 256
    return 128 if cout % 128 == 0 else cout


def _pick_hb(H, cout):
    if H <= 16:
        return H
    if cout >= 64 and H % 16 == 0:
        return 16
    return 8 if H % 8 == 0 else H


def deconv2x(xs, w, *, apply_tanh=False, out_dtype=jnp.bfloat16, hb=None):
    """y = ConvTranspose2d(relu(concat(xs, axis=-1)), 4, 2, 1, bias=False) [+ tanh].

    xs: tuple of 1 or 2 (N, H, W, Ck) maps; w: pre-blocked (nblk, 4, 4, sum(Ck), cb) bf16.
    Returns (N, 2H, 2W, nblk*cb) in `out_dtype`.
    """
    x1 = xs[0]
    N, H, W, _ = x1.shape
    Cin = sum(int(x.shape[-1]) for x in xs)
    nblk, kh_, kw_, cin_w, cb = (int(s) for s in w.shape)
    assert (kh_, kw_, cin_w) == (4, 4, Cin)
    Cout = nblk * cb
    if hb is None:
        hb = _pick_hb(H, Cout)
    assert H % hb == 0
    nh = H // hb

    kernel_fn = _deconv_kernel2 if len(xs) == 2 else _deconv_kernel1
    kernel = functools.partial(kernel_fn, apply_tanh=apply_tanh)

    in_specs = [pl.BlockSpec(x.shape, lambda i, hi: (0, 0, 0, 0)) for x in xs]
    in_specs.append(pl.BlockSpec((1, 4, 4, Cin, cb), lambda i, hi: (i, 0, 0, 0, 0)))

    quarters = pl.pallas_call(
        kernel,
        out_shape=jax.ShapeDtypeStruct((N, 4, H, W, Cout), out_dtype),
        grid_spec=pltpu.PrefetchScalarGridSpec(
            num_scalar_prefetch=0,
            grid=(nblk, nh),
            in_specs=in_specs,
            out_specs=pl.BlockSpec((N, 4, hb, W, cb), lambda i, hi: (0, 0, hi, 0, i)),
            scratch_shapes=[pltpu.VMEM((N, H + 2, W + 2, Cin), jnp.bfloat16)]),
        compiler_params=pltpu.CompilerParams(
            dimension_semantics=("parallel", "parallel")),
    )(*xs, w)

    # TODO(synk): pixel-shuffle of the 4 parity quarters stays an XLA transpose (bf16, cheap
    # vs. weight DMA); fusing it into the kernel would need strided / parity-aware stores.
    q = quarters.reshape(N, 2, 2, H, W, Cout)
    q = jnp.transpose(q, (0, 3, 1, 4, 2, 5))                     # (N, H, dy, W, dx, C)
    return q.reshape(N, 2 * H, 2 * W, Cout)


# --------------------------------------------------------------------------------------
# Kernel 2: fused BatchNorm2d (training-mode batch stats) [+ dropout(p), in-kernel hash RNG]
# --------------------------------------------------------------------------------------
def _hash_bits31(idx, seed):
    """Cheap per-element integer hash -> uniform 31-bit value (non-negative int32)."""
    x = idx ^ (seed * jnp.int32(0x27D4EB2F))
    x = x * jnp.int32(0x7FEB352D)
    x = x ^ jnp.right_shift(x, 15)
    x = x * jnp.int32(0x485D3B9B)
    x = x ^ jnp.right_shift(x, 13)
    return jnp.bitwise_and(x, jnp.int32(0x7FFFFFFF))


def _bn_normalize(x_ref, gamma_ref, beta_ref):
    """Training-mode BatchNorm2d: batch statistics, two-pass mean/var, all math in f32."""
    C = x_ref.shape[-1]
    y = x_ref[...].astype(jnp.float32).reshape(-1, C)
    inv_m = 1.0 / y.shape[0]
    mean = jnp.sum(y, axis=0, keepdims=True) * inv_m
    d = y - mean
    var = jnp.sum(d * d, axis=0, keepdims=True) * inv_m      # biased var (PyTorch training BN)
    return d * jax.lax.rsqrt(var + 1e-5) * gamma_ref[...] + beta_ref[...]


def _bn_kernel(x_ref, gamma_ref, beta_ref, out_ref):
    yn = _bn_normalize(x_ref, gamma_ref, beta_ref)
    out_ref[...] = yn.reshape(out_ref.shape).astype(out_ref.dtype)


def _bn_dropout_kernel(seed_ref, x_ref, gamma_ref, beta_ref, out_ref, *, p_drop):
    yn = _bn_normalize(x_ref, gamma_ref, beta_ref)
    m, C = yn.shape
    idx = (jax.lax.broadcasted_iota(jnp.int32, (m, C), 0) * C
           + jax.lax.broadcasted_iota(jnp.int32, (m, C), 1))
    bits = _hash_bits31(idx, seed_ref[0])
    thresh = jnp.int32(min(int(p_drop * 2147483648.0), 2147483647))
    keep = bits >= thresh                                     # P(keep) = 1 - p_drop
    yn = jnp.where(keep, yn * (1.0 / (1.0 - p_drop)), 0.0)
    out_ref[...] = yn.reshape(out_ref.shape).astype(out_ref.dtype)


def bn_dropout(y, gamma, beta, *, seed=None, p_drop=0.0, out_dtype=jnp.bfloat16):
    C = y.shape[-1]
    g = gamma.reshape(1, C).astype(jnp.float32)
    b = beta.reshape(1, C).astype(jnp.float32)
    if p_drop == 0.0:
        return pl.pallas_call(
            _bn_kernel,
            out_shape=jax.ShapeDtypeStruct(y.shape, out_dtype),
        )(y, g, b)
    seed = jnp.asarray(seed, jnp.int32).reshape((1,))
    return pl.pallas_call(
        functools.partial(_bn_dropout_kernel, p_drop=p_drop),
        out_shape=jax.ShapeDtypeStruct(y.shape, out_dtype),
        in_specs=[pl.BlockSpec(memory_space=pltpu.MemorySpace.SMEM),   # seed scalar
                  pl.BlockSpec(memory_space=pltpu.MemorySpace.VMEM),
                  pl.BlockSpec(memory_space=pltpu.MemorySpace.VMEM),
                  pl.BlockSpec(memory_space=pltpu.MemorySpace.VMEM)],
    )(seed, y, g, b)


# --------------------------------------------------------------------------------------
# Decoder forward (matches UnetDecoder.forward; concat is fused into the next deconv)
# --------------------------------------------------------------------------------------
def decoder_forward(sk_features, params, seeds):
    e1, e2, e3, e4, e5, e6, e7 = sk_features
    s1, s2, s3 = seeds

    d = deconv2x((e7,), params['w1'])
    d = bn_dropout(d, params['g1'], params['b1'], seed=s1, p_drop=0.5)      # d1 (cat e6 below)
    d = deconv2x((d, e6), params['w2'])
    d = bn_dropout(d, params['g2'], params['b2'], seed=s2, p_drop=0.5)      # d2 (cat e5 below)
    d = deconv2x((d, e5), params['w3'])
    d = bn_dropout(d, params['g3'], params['b3'], seed=s3, p_drop=0.5)      # d3 (cat e4 below)
    d = deconv2x((d, e4), params['w4'])
    d = bn_dropout(d, params['g4'], params['b4'])                           # d4 (cat e3 below)
    d = deconv2x((d, e3), params['w5'])
    d = bn_dropout(d, params['g5'], params['b5'])                           # d5 (cat e2 below)
    d = deconv2x((d, e2), params['w6'])
    d = bn_dropout(d, params['g6'], params['b6'])                           # d6 (cat e1 below)
    return deconv2x((d, e1), params['w7'], apply_tanh=True, out_dtype=jnp.float32)


# --------------------------------------------------------------------------------------
# Deterministic parameter / input construction
# --------------------------------------------------------------------------------------
def convert_pt_weight(w_pt, cb=None):
    """PyTorch ConvTranspose2d weight (Cin, Cout, kh, kw) -> pre-blocked
    (Cout/cb, kh, kw, Cin, cb) bf16 so every per-block weight DMA is one contiguous burst."""
    cin, cout = int(w_pt.shape[0]), int(w_pt.shape[1])
    if cb is None:
        cb = _pick_cb(cout)
    assert cout % cb == 0
    w = jnp.transpose(w_pt, (2, 3, 0, 1)).astype(jnp.bfloat16)        # (kh, kw, Cin, Cout)
    w = w.reshape(4, 4, cin, cout // cb, cb)
    return jnp.transpose(w, (3, 0, 1, 2, 4))                          # (nblk, kh, kw, Cin, cb)


def init_params(key):
    ks = jax.random.split(key, 7)

    def w(k, cin, cout):
        w_pt = jax.random.normal(k, (cin, cout, 4, 4), jnp.float32) * 0.05
        return convert_pt_weight(w_pt)

    p = {
        'w1': w(ks[0], D * 8, D * 8),
        'w2': w(ks[1], D * 8 * 2, D * 8),
        'w3': w(ks[2], D * 8 * 2, D * 8),
        'w4': w(ks[3], D * 8 * 2, D * 4),
        'w5': w(ks[4], D * 4 * 2, D * 2),
        'w6': w(ks[5], D * 2 * 2, D),
        'w7': w(ks[6], D * 2, OUTPUT_NC),
    }
    for i, c in zip(range(1, 7), (D * 8, D * 8, D * 8, D * 4, D * 2, D)):
        p[f'g{i}'] = jnp.ones((c,), jnp.float32)     # BatchNorm weight init
        p[f'b{i}'] = jnp.zeros((c,), jnp.float32)    # BatchNorm bias init
    return p


def make_features(key):
    """Skip features e1..e7 (NHWC).  Pre-cast to bf16 once, outside the jitted forward."""
    N = 1
    shapes = [(N, 64, 64, 64), (N, 32, 32, 128), (N, 16, 16, 256), (N, 8, 8, 512),
              (N, 4, 4, 512), (N, 2, 2, 512), (N, 1, 1, 512)]
    ks = jax.random.split(key, 7)
    return tuple(jax.random.normal(k, s, jnp.float32).astype(jnp.bfloat16)
                 for k, s in zip(ks, shapes))


# Pure-JAX reference for relu + transposed conv (bf16 operands, f32 accumulation) used as a
# correctness spot-check of the Pallas kernel.
def _convtranspose_ref(x, w_pt):
    lhs = jnp.maximum(x, 0.0).astype(jnp.bfloat16).astype(jnp.float32)
    k = jnp.transpose(w_pt[:, :, ::-1, ::-1], (2, 3, 0, 1))      # HWIO, spatially flipped
    rhs = k.astype(jnp.bfloat16).astype(jnp.float32)
    return jax.lax.conv_general_dilated(
        lhs, rhs, window_strides=(1, 1), padding=((2, 2), (2, 2)),
        lhs_dilation=(2, 2), rhs_dilation=(1, 1),
        dimension_numbers=("NHWC", "HWIO", "NHWC"),
        precision=jax.lax.Precision.HIGHEST)


if __name__ == "__main__":
    root = jax.random.PRNGKey(0)
    k_par, k_feat, k_chk1, k_chk2, k_chk3, k_bn = jax.random.split(root, 6)

    # Spot-check A: single-input deconv, 4 row blocks (exercises per-step halo fill).
    kx, kw0 = jax.random.split(k_chk1)
    xt = jax.random.normal(kx, (1, 16, 16, 32), jnp.float32)
    wt = jax.random.normal(kw0, (32, 16, 4, 4), jnp.float32) * 0.05
    got = jax.block_until_ready(
        deconv2x((xt,), convert_pt_weight(wt), out_dtype=jnp.float32, hb=4))
    want = _convtranspose_ref(xt, wt)
    np.testing.assert_allclose(np.asarray(got), np.asarray(want), rtol=2e-2, atol=2e-2)

    # Spot-check B: two-input deconv with fused concat + Cout blocking (nblk=2) + row blocks.
    kx1, kx2, kw1 = jax.random.split(k_chk2, 3)
    xa = jax.random.normal(kx1, (1, 8, 8, 64), jnp.float32)
    xb = jax.random.normal(kx2, (1, 8, 8, 64), jnp.float32)
    wt2 = jax.random.normal(kw1, (128, 256, 4, 4), jnp.float32) * 0.05
    got2 = jax.block_until_ready(
        deconv2x((xa, xb), convert_pt_weight(wt2, cb=128), out_dtype=jnp.float32, hb=4))
    want2 = _convtranspose_ref(jnp.concatenate([xa, xb], axis=-1), wt2)
    np.testing.assert_allclose(np.asarray(got2), np.asarray(want2), rtol=2e-2, atol=2e-2)

    # Spot-check C: small-Cout final-layer config with fused tanh.
    kx3, kx4, kw2 = jax.random.split(k_chk3, 3)
    xc = jax.random.normal(kx3, (1, 16, 16, 16), jnp.float32)
    xd = jax.random.normal(kx4, (1, 16, 16, 16), jnp.float32)
    wt3 = jax.random.normal(kw2, (32, 3, 4, 4), jnp.float32) * 0.05
    got3 = jax.block_until_ready(
        deconv2x((xc, xd), convert_pt_weight(wt3), apply_tanh=True,
                 out_dtype=jnp.float32, hb=8))
    want3 = jnp.tanh(_convtranspose_ref(jnp.concatenate([xc, xd], axis=-1), wt3))
    np.testing.assert_allclose(np.asarray(got3), np.asarray(want3), rtol=2e-2, atol=2e-2)

    # Spot-check D: BatchNorm kernel (training-mode batch stats) vs pure-JAX reference.
    yb = jax.random.normal(k_bn, (1, 8, 8, 64), jnp.float32) * 2.0 + 0.5
    gb = jnp.linspace(0.5, 1.5, 64, dtype=jnp.float32)
    bb = jnp.linspace(-0.2, 0.2, 64, dtype=jnp.float32)
    got_bn = bn_dropout(yb.astype(jnp.bfloat16), gb, bb)
    ybf = yb.astype(jnp.bfloat16).astype(jnp.float32)
    mu = ybf.mean(axis=(0, 1, 2))
    var = ybf.var(axis=(0, 1, 2))
    want_bn = (ybf - mu) / jnp.sqrt(var + 1e-5) * gb + bb
    np.testing.assert_allclose(np.asarray(got_bn.astype(jnp.float32)), np.asarray(want_bn),
                               rtol=2e-2, atol=5e-2)

    # Spot-check E: dropout drops roughly half the elements.
    got_do = bn_dropout(yb.astype(jnp.bfloat16), gb, bb,
                        seed=jnp.asarray([123], jnp.int32), p_drop=0.5)
    drop_frac = float(jnp.mean((got_do == 0).astype(jnp.float32)))
    assert 0.3 < drop_frac < 0.7, drop_frac

    # Full decoder forward.
    params = init_params(k_par)
    sk_features = make_features(k_feat)
    seeds = tuple(jnp.asarray([s], jnp.int32) for s in (12345, 23456, 34567))

    out = jax.jit(decoder_forward)(sk_features, params, seeds)
    out = jax.block_until_ready(out)
    assert out.shape == (1, 128, 128, OUTPUT_NC)
    assert out.dtype == jnp.float32
    assert bool(jnp.all(jnp.isfinite(out)))
    print("KERNEL_OK")
</pallas_src>

<mosaic_0001>
module attributes {stable_mosaic.version = 11 : i64} {
  func.func @_deconv_kernel1(%arg0: i32, %arg1: i32, %arg2: memref<1x16x16x32xf32, #tpu.memory_space<vmem>>, %arg3: memref<1x4x4x32x16xbf16, #tpu.memory_space<vmem>>, %arg4: memref<1x4x4x16x16xf32, #tpu.memory_space<vmem>>, %arg5: memref<1x18x18x32xbf16, #tpu.memory_space<vmem>>) attributes {dimension_semantics = [#tpu.dimension_semantics<parallel>, #tpu.dimension_semantics<parallel>], iteration_bounds = array<i64: 1, 4>, scalar_prefetch = 0 : i64, scratch_operands = 1 : i64, tpu.core_type = #tpu.core_type<tc>, window_params = [{pipeline_mode = #tpu.pipeline_mode<synchronous>, transform_indices = @transform_0, window_bounds = array<i64: 1, 16, 16, 32>}, {transform_indices = @transform_1, window_bounds = array<i64: 1, 4, 4, 32, 16>}, {transform_indices = @transform_2, window_bounds = array<i64: 1, 4, 4, 16, 16>}]} {
    %c4_i32 = arith.constant 4 : i32
    %0 = arith.muli %arg1, %c4_i32 : i32
    %cst = arith.constant 0.000000e+00 : bf16
    %1 = vector.broadcast %cst : bf16 to vector<1x1x18x32xbf16>
    %c0_i32 = arith.constant 0 : i32
    %2 = arith.cmpi eq, %arg1, %c0_i32 : i32
    %3 = arith.extui %2 : i1 to i32
    %c0_i32_0 = arith.constant 0 : i32
    %4 = arith.cmpi ne, %3, %c0_i32_0 : i32
    scf.if %4 {
      %c0_170 = arith.constant 0 : index
      %c0_171 = arith.constant 0 : index
      %c0_172 = arith.constant 0 : index
      %c0_173 = arith.constant 0 : index
      %147 = vector.load %arg5[%c0_170, %c0_171, %c0_172, %c0_173] : memref<1x18x18x32xbf16, #tpu.memory_space<vmem>>, vector<1x1x18x32xbf16>
      tpu.vector_store %arg5[%c0_170, %c0_171, %c0_172, %c0_173], %1 {strides = array<i32>} : memref<1x18x18x32xbf16, #tpu.memory_space<vmem>>, vector<1x1x18x32xbf16>,
    } else {
    }
    %c3_i32 = arith.constant 3 : i32
    %5 = arith.cmpi eq, %arg1, %c3_i32 : i32
    %6 = arith.extui %5 : i1 to i32
    %c0_i32_1 = arith.constant 0 : i32
    %7 = arith.cmpi ne, %6, %c0_i32_1 : i32
    scf.if %7 {
      %c0_170 = arith.constant 0 : index
      %c17_171 = arith.constant 17 : index
      %c0_172 = arith.constant 0 : index
      %c0_173 = arith.constant 0 : index
      %147 = vector.load %arg5[%c0_170, %c17_171, %c0_172, %c0_173] : memref<1x18x18x32xbf16, #tpu.memory_space<vmem>>, vector<1x1x18x32xbf16>
      tpu.vector_store %arg5[%c0_170, %c17_171, %c0_172, %c0_173], %1 {strides = array<i32>} : memref<1x18x18x32xbf16, #tpu.memory_space<vmem>>, vector<1x1x18x32xbf16>,
    } else {
    }
    %cst_2 = arith.constant 0.000000e+00 : bf16
    %8 = vector.broadcast %cst_2 : bf16 to vector<1x6x1x32xbf16>
    %c0 = arith.constant 0 : index
    %9 = arith.index_cast %0 : i32 to index
    %c0_3 = arith.constant 0 : index
    %c0_4 = arith.constant 0 : index
    %10 = vector.load %arg5[%c0, %9, %c0_3, %c0_4] : memref<1x18x18x32xbf16, #tpu.memory_space<vmem>>, vector<1x6x1x32xbf16>
    tpu.vector_store %arg5[%c0, %9, %c0_3, %c0_4], %8 {strides = array<i32>} : memref<1x18x18x32xbf16, #tpu.memory_space<vmem>>, vector<1x6x1x32xbf16>,
    %c0_5 = arith.constant 0 : index
    %11 = arith.index_cast %0 : i32 to index
    %c17 = arith.constant 17 : index
    %c0_6 = arith.constant 0 : index
    %12 = vector.load %arg5[%c0_5, %11, %c17, %c0_6] : memref<1x18x18x32xbf16, #tpu.memory_space<vmem>>, vector<1x6x1x32xbf16>
    tpu.vector_store %arg5[%c0_5, %11, %c17, %c0_6], %8 {strides = array<i32>} : memref<1x18x18x32xbf16, #tpu.memory_space<vmem>>, vector<1x6x1x32xbf16>,
    %c0_7 = arith.constant 0 : index
    %13 = arith.index_cast %0 : i32 to index
    %c0_8 = arith.constant 0 : index
    %c0_9 = arith.constant 0 : index
    %14 = vector.load %arg2[%c0_7, %13, %c0_8, %c0_9] : memref<1x16x16x32xf32, #tpu.memory_space<vmem>>, vector<1x4x16x32xf32>
    %cst_10 = arith.constant 0.000000e+00 : f32
    %15 = vector.broadcast %cst_10 : f32 to vector<1x4x16x32xf32>
    %16 = arith.maximumf %14, %15 : vector<1x4x16x32xf32>
    %17 = arith.truncf %16 : vector<1x4x16x32xf32> to vector<1x4x16x32xbf16>
    %c1_i32 = arith.constant 1 : i32
    %18 = arith.addi %0, %c1_i32 : i32
    %c0_11 = arith.constant 0 : index
    %19 = arith.index_cast %18 : i32 to index
    %c1 = arith.constant 1 : index
    %c0_12 = arith.constant 0 : index
    %20 = vector.load %arg5[%c0_11, %19, %c1, %c0_12] : memref<1x18x18x32xbf16, #tpu.memory_space<vmem>>, vector<1x4x16x32xbf16>
    tpu.vector_store %arg5[%c0_11, %19, %c1, %c0_12], %17 {strides = array<i32>} : memref<1x18x18x32xbf16, #tpu.memory_space<vmem>>, vector<1x4x16x32xbf16>,
    %c0_i32_13 = arith.constant 0 : i32
    %21 = arith.cmpi sgt, %arg1, %c0_i32_13 : i32
    %22 = arith.extui %21 : i1 to i32
    %c0_i32_14 = arith.constant 0 : i32
    %23 = arith.cmpi ne, %22, %c0_i32_14 : i32
    scf.if %23 {
      %c1_i32_170 = arith.constant 1 : i32
      %147 = arith.subi %0, %c1_i32_170 : i32
      %c0_171 = arith.constant 0 : index
      %148 = arith.index_cast %147 : i32 to index
      %c0_172 = arith.constant 0 : index
      %c0_173 = arith.constant 0 : index
      %149 = vector.load %arg2[%c0_171, %148, %c0_172, %c0_173] : memref<1x16x16x32xf32, #tpu.memory_space<vmem>>, vector<1x1x16x32xf32>
      %cst_174 = arith.constant 0.000000e+00 : f32
      %150 = vector.broadcast %cst_174 : f32 to vector<1x1x16x32xf32>
      %151 = arith.maximumf %149, %150 : vector<1x1x16x32xf32>
      %152 = arith.truncf %151 : vector<1x1x16x32xf32> to vector<1x1x16x32xbf16>
      %c0_175 = arith.constant 0 : index
      %153 = arith.index_cast %0 : i32 to index
      %c1_176 = arith.constant 1 : index
      %c0_177 = arith.constant 0 : index
      %154 = vector.load %arg5[%c0_175, %153, %c1_176, %c0_177] : memref<1x18x18x32xbf16, #tpu.memory_space<vmem>>, vector<1x1x16x32xbf16>
      tpu.vector_store %arg5[%c0_175, %153, %c1_176, %c0_177], %152 {strides = array<i32>} : memref<1x18x18x32xbf16, #tpu.memory_space<vmem>>, vector<1x1x16x32xbf16>,
    } else {
    }
    %c3_i32_15 = arith.constant 3 : i32
    %24 = arith.cmpi slt, %arg1, %c3_i32_15 : i32
    %25 = arith.extui %24 : i1 to i32
    %c0_i32_16 = arith.constant 0 : i32
    %26 = arith.cmpi ne, %25, %c0_i32_16 : i32
    scf.if %26 {
      %c4_i32_170 = arith.constant 4 : i32
      %147 = arith.addi %0, %c4_i32_170 : i32
      %c0_171 = arith.constant 0 : index
      %148 = arith.index_cast %147 : i32 to index
      %c0_172 = arith.constant 0 : index
      %c0_173 = arith.constant 0 : index
      %149 = vector.load %arg2[%c0_171, %148, %c0_172, %c0_173] : memref<1x16x16x32xf32, #tpu.memory_space<vmem>>, vector<1x1x16x32xf32>
      %cst_174 = arith.constant 0.000000e+00 : f32
      %150 = vector.broadcast %cst_174 : f32 to vector<1x1x16x32xf32>
      %151 = arith.maximumf %149, %150 : vector<1x1x16x32xf32>
      %152 = arith.truncf %151 : vector<1x1x16x32xf32> to vector<1x1x16x32xbf16>
      %c4_i32_175 = arith.constant 4 : i32
      %153 = arith.addi %0, %c4_i32_175 : i32
      %c1_i32_176 = arith.constant 1 : i32
      %154 = arith.addi %153, %c1_i32_176 : i32
      %c0_177 = arith.constant 0 : index
      %155 = arith.index_cast %154 : i32 to index
      %c1_178 = arith.constant 1 : index
      %c0_179 = arith.constant 0 : index
      %156 = vector.load %arg5[%c0_177, %155, %c1_178, %c0_179] : memref<1x18x18x32xbf16, #tpu.memory_space<vmem>>, vector<1x1x16x32xbf16>
      tpu.vector_store %arg5[%c0_177, %155, %c1_178, %c0_179], %152 {strides = array<i32>} : memref<1x18x18x32xbf16, #tpu.memory_space<vmem>>, vector<1x1x16x32xbf16>,
    } else {
    }
    %cst_17 = arith.constant 0.000000e+00 : f32
    %27 = vector.broadcast %cst_17 : f32 to vector<64x16xf32>
    %cst_18 = arith.constant 0.000000e+00 : f32
    %28 = vector.broadcast %cst_18 : f32 to vector<64x16xf32>
    %cst_19 = arith.constant 0.000000e+00 : f32
    %29 = vector.broadcast %cst_19 : f32 to vector<64x16xf32>
    %cst_20 = arith.constant 0.000000e+00 : f32
    %30 = vector.broadcast %cst_20 : f32 to vector<64x16xf32>
    %c0_i32_21 = arith.constant 0 : i32
    %31 = arith.addi %0, %c0_i32_21 : i32
    %c0_22 = arith.constant 0 : index
    %32 = arith.index_cast %31 : i32 to index
    %c0_23 = arith.constant 0 : index
    %c0_24 = arith.constant 0 : index
    %33 = vector.load %arg5[%c0_22, %32, %c0_23, %c0_24] : memref<1x18x18x32xbf16, #tpu.memory_space<vmem>>, vector<1x4x16x32xbf16>
    %34 = vector.shape_cast %33 : vector<1x4x16x32xbf16> to vector<64x32xbf16>
    %c0_25 = arith.constant 0 : index
    %c3 = arith.constant 3 : index
    %c3_26 = arith.constant 3 : index
    %c0_27 = arith.constant 0 : index
    %c0_28 = arith.constant 0 : index
    %35 = vector.load %arg3[%c0_25, %c3, %c3_26, %c0_27, %c0_28] : memref<1x4x4x32x16xbf16, #tpu.memory_space<vmem>>, vector<1x1x1x32x16xbf16>
    %36 = vector.shape_cast %35 : vector<1x1x1x32x16xbf16> to vector<32x16xbf16>
    %cst_29 = arith.constant dense<0.000000e+00> : vector<64x16xf32>
    %37 = tpu.matmul %34, %36, %cst_29 {dimension_numbers = #tpu.dot_dimension_numbers<[1], [0], [0], [1], [0, 0, 1, 1], [], []>} : vector<64x32xbf16>, vector<32x16xbf16>, vector<64x16xf32> -> vector<64x16xf32>
    %38 = arith.addf %27, %37 : vector<64x16xf32>
    %c0_i32_30 = arith.constant 0 : i32
    %39 = arith.addi %0, %c0_i32_30 : i32
    %c0_31 = arith.constant 0 : index
    %40 = arith.index_cast %39 : i32 to index
    %c1_32 = arith.constant 1 : index
    %c0_33 = arith.constant 0 : index
    %41 = vector.load %arg5[%c0_31, %40, %c1_32, %c0_33] : memref<1x18x18x32xbf16, #tpu.memory_space<vmem>>, vector<1x4x16x32xbf16>
    %42 = vector.shape_cast %41 : vector<1x4x16x32xbf16> to vector<64x32xbf16>
    %c0_34 = arith.constant 0 : index
    %c3_35 = arith.constant 3 : index
    %c1_36 = arith.constant 1 : index
    %c0_37 = arith.constant 0 : index
    %c0_38 = arith.constant 0 : index
    %43 = vector.load %arg3[%c0_34, %c3_35, %c1_36, %c0_37, %c0_38] : memref<1x4x4x32x16xbf16, #tpu.memory_space<vmem>>, vector<1x1x1x32x16xbf16>
    %44 = vector.shape_cast %43 : vector<1x1x1x32x16xbf16> to vector<32x16xbf16>
    %cst_39 = arith.constant dense<0.000000e+00> : vector<64x16xf32>
    %45 = tpu.matmul %42, %44, %cst_39 {dimension_numbers = #tpu.dot_dimension_numbers<[1], [0], [0], [1], [0, 0, 1, 1], [], []>} : vector<64x32xbf16>, vector<32x16xbf16>, vector<64x16xf32> -> vector<64x16xf32>
    %46 = arith.addf %38, %45 : vector<64x16xf32>
    %c0_40 = arith.constant 0 : index
    %c3_41 = arith.constant 3 : index
    %c2 = arith.constant 2 : index
    %c0_42 = arith.constant 0 : index
    %c0_43 = arith.constant 0 : index
    %47 = vector.load %arg3[%c0_40, %c3_41, %c2, %c0_42, %c0_43] : memref<1x4x4x32x16xbf16, #tpu.memory_space<vmem>>, vector<1x1x1x32x16xbf16>
    %48 = vector.shape_cast %47 : vector<1x1x1x32x16xbf16> to vector<32x16xbf16>
    %cst_44 = arith.constant dense<0.000000e+00> : vector<64x16xf32>
    %49 = tpu.matmul %42, %48, %cst_44 {dimension_numbers = #tpu.dot_dimension_numbers<[1], [0], [0], [1], [0, 0, 1, 1], [], []>} : vector<64x32xbf16>, vector<32x16xbf16>, vector<64x16xf32> -> vector<64x16xf32>
    %50 = arith.addf %28, %49 : vector<64x16xf32>
    %c0_i32_45 = arith.constant 0 : i32
    %51 = arith.addi %0, %c0_i32_45 : i32
    %c0_46 = arith.constant 0 : index
    %52 = arith.index_cast %51 : i32 to index
    %c2_47 = arith.constant 2 : index
    %c0_48 = arith.constant 0 : index
    %53 = vector.load %arg5[%c0_46, %52, %c2_47, %c0_48] : memref<1x18x18x32xbf16, #tpu.memory_space<vmem>>, vector<1x4x16x32xbf16>
    %54 = vector.shape_cast %53 : vector<1x4x16x32xbf16> to vector<64x32xbf16>
    %c0_49 = arith.constant 0 : index
    %c3_50 = arith.constant 3 : index
    %c0_51 = arith.constant 0 : index
    %c0_52 = arith.constant 0 : index
    %c0_53 = arith.constant 0 : index
    %55 = vector.load %arg3[%c0_49, %c3_50, %c0_51, %c0_52, %c0_53] : memref<1x4x4x32x16xbf16, #tpu.memory_space<vmem>>, vector<1x1x1x32x16xbf16>
    %56 = vector.shape_cast %55 : vector<1x1x1x32x16xbf16> to vector<32x16xbf16>
    %cst_54 = arith.constant dense<0.000000e+00> : vector<64x16xf32>
    %57 = tpu.matmul %54, %56, %cst_54 {dimension_numbers = #tpu.dot_dimension_numbers<[1], [0], [0], [1], [0, 0, 1, 1], [], []>} : vector<64x32xbf16>, vector<32x16xbf16>, vector<64x16xf32> -> vector<64x16xf32>
    %58 = arith.addf %50, %57 : vector<64x16xf32>
    %c1_i32_55 = arith.constant 1 : i32
    %59 = arith.addi %0, %c1_i32_55 : i32
    %c0_56 = arith.constant 0 : index
    %60 = arith.index_cast %59 : i32 to index
    %c0_57 = arith.constant 0 : index
    %c0_58 = arith.constant 0 : index
    %61 = vector.load %arg5[%c0_56, %60, %c0_57, %c0_58] : memref<1x18x18x32xbf16, #tpu.memory_space<vmem>>, vector<1x4x16x32xbf16>
    %62 = vector.shape_cast %61 : vector<1x4x16x32xbf16> to vector<64x32xbf16>
    %c0_59 = arith.constant 0 : index
    %c1_60 = arith.constant 1 : index
    %c3_61 = arith.constant 3 : index
    %c0_62 = arith.constant 0 : index
    %c0_63 = arith.constant 0 : index
    %63 = vector.load %arg3[%c0_59, %c1_60, %c3_61, %c0_62, %c0_63] : memref<1x4x4x32x16xbf16, #tpu.memory_space<vmem>>, vector<1x1x1x32x16xbf16>
    %64 = vector.shape_cast %63 : vector<1x1x1x32x16xbf16> to vector<32x16xbf16>
    %cst_64 = arith.constant dense<0.000000e+00> : vector<64x16xf32>
    %65 = tpu.matmul %62, %64, %cst_64 {dimension_numbers = #tpu.dot_dimension_numbers<[1], [0], [0], [1], [0, 0, 1, 1], [], []>} : vector<64x32xbf16>, vector<32x16xbf16>, vector<64x16xf32> -> vector<64x16xf32>
    %66 = arith.addf %46, %65 : vector<64x16xf32>
    %c0_65 = arith.constant 0 : index
    %c2_66 = arith.constant 2 : index
    %c3_67 = arith.constant 3 : index
    %c0_68 = arith.constant 0 : index
    %c0_69 = arith.constant 0 : index
    %67 = vector.load %arg3[%c0_65, %c2_66, %c3_67, %c0_68, %c0_69] : memref<1x4x4x32x16xbf16, #tpu.memory_space<vmem>>, vector<1x1x1x32x16xbf16>
    %68 = vector.shape_cast %67 : vector<1x1x1x32x16xbf16> to vector<32x16xbf16>
    %cst_70 = arith.constant dense<0.000000e+00> : vector<64x16xf32>
    %69 = tpu.matmul %62, %68, %cst_70 {dimension_numbers = #tpu.dot_dimension_numbers<[1], [0], [0], [1], [0, 0, 1, 1], [], []>} : vector<64x32xbf16>, vector<32x16xbf16>, vector<64x16xf32> -> vector<64x16xf32>
    %70 = arith.addf %29, %69 : vector<64x16xf32>
    %c1_i32_71 = arith.constant 1 : i32
    %71 = arith.addi %0, %c1_i32_71 : i32
    %c0_72 = arith.constant 0 : index
    %72 = arith.index_cast %71 : i32 to index
    %c1_73 = arith.constant 1 : index
    %c0_74 = arith.constant 0 : index
    %73 = vector.load %arg5[%c0_72, %72, %c1_73, %c0_74] : memref<1x18x18x32xbf16, #tpu.memory_space<vmem>>, vector<1x4x16x32xbf16>
    %74 = vector.shape_cast %73 : vector<1x4x16x32xbf16> to vector<64x32xbf16>
    %c0_75 = arith.constant 0 : index
    %c1_76 = arith.constant 1 : index
    %c1_77 = arith.constant 1 : index
    %c0_78 = arith.constant 0 : index
    %c0_79 = arith.constant 0 : index
    %75 = vector.load %arg3[%c0_75, %c1_76, %c1_77, %c0_78, %c0_79] : memref<1x4x4x32x16xbf16, #tpu.memory_space<vmem>>, vector<1x1x1x32x16xbf16>
    %76 = vector.shape_cast %75 : vector<1x1x1x32x16xbf16> to vector<32x16xbf16>
    %cst_80 = arith.constant dense<0.000000e+00> : vector<64x16xf32>
    %77 = tpu.matmul %74, %76, %cst_80 {dimension_numbers = #tpu.dot_dimension_numbers<[1], [0], [0], [1], [0, 0, 1, 1], [], []>} : vector<64x32xbf16>, vector<32x16xbf16>, vector<64x16xf32> -> vector<64x16xf32>
    %78 = arith.addf %66, %77 : vector<64x16xf32>
    %c0_81 = arith.constant 0 : index
    %c1_82 = arith.constant 1 : index
    %c2_83 = arith.constant 2 : index
    %c0_84 = arith.constant 0 : index
    %c0_85 = arith.constant 0 : index
    %79 = vector.load %arg3[%c0_81, %c1_82, %c2_83, %c0_84, %c0_85] : memref<1x4x4x32x16xbf16, #tpu.memory_space<vmem>>, vector<1x1x1x32x16xbf16>
    %80 = vector.shape_cast %79 : vector<1x1x1x32x16xbf16> to vector<32x16xbf16>
    %cst_86 = arith.constant dense<0.000000e+00> : vector<64x16xf32>
    %81 = tpu.matmul %74, %80, %cst_86 {dimension_numbers = #tpu.dot_dimension_numbers<[1], [0], [0], [1], [0, 0, 1, 1], [], []>} : vector<64x32xbf16>, vector<32x16xbf16>, vector<64x16xf32> -> vector<64x16xf32>
    %82 = arith.addf %58, %81 : vector<64x16xf32>
    %c0_87 = arith.constant 0 : index
    %c2_88 = arith.constant 2 : index
    %c1_89 = arith.constant 1 : index
    %c0_90 = arith.constant 0 : index
    %c0_91 = arith.constant 0 : index
    %83 = vector.load %arg3[%c0_87, %c2_88, %c1_89, %c0_90, %c0_91] : memref<1x4x4x32x16xbf16, #tpu.memory_space<vmem>>, vector<1x1x1x32x16xbf16>
    %84 = vector.shape_cast %83 : vector<1x1x1x32x16xbf16> to vector<32x16xbf16>
    %cst_92 = arith.constant dense<0.000000e+00> : vector<64x16xf32>
    %85 = tpu.matmul %74, %84, %cst_92 {dimension_numbers = #tpu.dot_dimension_numbers<[1], [0], [0], [1], [0, 0, 1, 1], [], []>} : vector<64x32xbf16>, vector<32x16xbf16>, vector<64x16xf32> -> vector<64x16xf32>
    %86 = arith.addf %70, %85 : vector<64x16xf32>
    %c0_93 = arith.constant 0 : index
    %c2_94 = arith.constant 2 : index
    %c2_95 = arith.constant 2 : index
    %c0_96 = arith.constant 0 : index
    %c0_97 = arith.constant 0 : index
    %87 = vector.load %arg3[%c0_93, %c2_94, %c2_95, %c0_96, %c0_97] : memref<1x4x4x32x16xbf16, #tpu.memory_space<vmem>>, vector<1x1x1x32x16xbf16>
    %88 = vector.shape_cast %87 : vector<1x1x1x32x16xbf16> to vector<32x16xbf16>
    %cst_98 = arith.constant dense<0.000000e+00> : vector<64x16xf32>
    %89 = tpu.matmul %74, %88, %cst_98 {dimension_numbers = #tpu.dot_dimension_numbers<[1], [0], [0], [1], [0, 0, 1, 1], [], []>} : vector<64x32xbf16>, vector<32x16xbf16>, vector<64x16xf32> -> vector<64x16xf32>
    %90 = arith.addf %30, %89 : vector<64x16xf32>
    %c1_i32_99 = arith.constant 1 : i32
    %91 = arith.addi %0, %c1_i32_99 : i32
    %c0_100 = arith.constant 0 : index
    %92 = arith.index_cast %91 : i32 to index
    %c2_101 = arith.constant 2 : index
    %c0_102 = arith.constant 0 : index
    %93 = vector.load %arg5[%c0_100, %92, %c2_101, %c0_102] : memref<1x18x18x32xbf16, #tpu.memory_space<vmem>>, vector<1x4x16x32xbf16>
    %94 = vector.shape_cast %93 : vector<1x4x16x32xbf16> to vector<64x32xbf16>
    %c0_103 = arith.constant 0 : index
    %c1_104 = arith.constant 1 : index
    %c0_105 = arith.constant 0 : index
    %c0_106 = arith.constant 0 : index
    %c0_107 = arith.constant 0 : index
    %95 = vector.load %arg3[%c0_103, %c1_104, %c0_105, %c0_106, %c0_107] : memref<1x4x4x32x16xbf16, #tpu.memory_space<vmem>>, vector<1x1x1x32x16xbf16>
    %96 = vector.shape_cast %95 : vector<1x1x1x32x16xbf16> to vector<32x16xbf16>
    %cst_108 = arith.constant dense<0.000000e+00> : vector<64x16xf32>
    %97 = tpu.matmul %94, %96, %cst_108 {dimension_numbers = #tpu.dot_dimension_numbers<[1], [0], [0], [1], [0, 0, 1, 1], [], []>} : vector<64x32xbf16>, vector<32x16xbf16>, vector<64x16xf32> -> vector<64x16xf32>
    %98 = arith.addf %82, %97 : vector<64x16xf32>
    %c0_109 = arith.constant 0 : index
    %c2_110 = arith.constant 2 : index
    %c0_111 = arith.constant 0 : index
    %c0_112 = arith.constant 0 : index
    %c0_113 = arith.constant 0 : index
    %99 = vector.load %arg3[%c0_109, %c2_110, %c0_111, %c0_112, %c0_113] : memref<1x4x4x32x16xbf16, #tpu.memory_space<vmem>>, vector<1x1x1x32x16xbf16>
    %100 = vector.shape_cast %99 : vector<1x1x1x32x16xbf16> to vector<32x16xbf16>
    %cst_114 = arith.constant dense<0.000000e+00> : vector<64x16xf32>
    %101 = tpu.matmul %94, %100, %cst_114 {dimension_numbers = #tpu.dot_dimension_numbers<[1], [0], [0], [1], [0, 0, 1, 1], [], []>} : vector<64x32xbf16>, vector<32x16xbf16>, vector<64x16xf32> -> vector<64x16xf32>
    %102 = arith.addf %90, %101 : vector<64x16xf32>
    %c2_i32 = arith.constant 2 : i32
    %103 = arith.addi %0, %c2_i32 : i32
    %c0_115 = arith.constant 0 : index
    %104 = arith.index_cast %103 : i32 to index
    %c0_116 = arith.constant 0 : index
    %c0_117 = arith.constant 0 : index
    %105 = vector.load %arg5[%c0_115, %104, %c0_116, %c0_117] : memref<1x18x18x32xbf16, #tpu.memory_space<vmem>>, vector<1x4x16x32xbf16>
    %106 = vector.shape_cast %105 : vector<1x4x16x32xbf16> to vector<64x32xbf16>
    %c0_118 = arith.constant 0 : index
    %c0_119 = arith.constant 0 : index
    %c3_120 = arith.constant 3 : index
    %c0_121 = arith.constant 0 : index
    %c0_122 = arith.constant 0 : index
    %107 = vector.load %arg3[%c0_118, %c0_119, %c3_120, %c0_121, %c0_122] : memref<1x4x4x32x16xbf16, #tpu.memory_space<vmem>>, vector<1x1x1x32x16xbf16>
    %108 = vector.shape_cast %107 : vector<1x1x1x32x16xbf16> to vector<32x16xbf16>
    %cst_123 = arith.constant dense<0.000000e+00> : vector<64x16xf32>
    %109 = tpu.matmul %106, %108, %cst_123 {dimension_numbers = #tpu.dot_dimension_numbers<[1], [0], [0], [1], [0, 0, 1, 1], [], []>} : vector<64x32xbf16>, vector<32x16xbf16>, vector<64x16xf32> -> vector<64x16xf32>
    %110 = arith.addf %86, %109 : vector<64x16xf32>
    %c2_i32_124 = arith.constant 2 : i32
    %111 = arith.addi %0, %c2_i32_124 : i32
    %c0_125 = arith.constant 0 : index
    %112 = arith.index_cast %111 : i32 to index
    %c1_126 = arith.constant 1 : index
    %c0_127 = arith.constant 0 : index
    %113 = vector.load %arg5[%c0_125, %112, %c1_126, %c0_127] : memref<1x18x18x32xbf16, #tpu.memory_space<vmem>>, vector<1x4x16x32xbf16>
    %114 = vector.shape_cast %113 : vector<1x4x16x32xbf16> to vector<64x32xbf16>
    %c0_128 = arith.constant 0 : index
    %c0_129 = arith.constant 0 : index
    %c1_130 = arith.constant 1 : index
    %c0_131 = arith.constant 0 : index
    %c0_132 = arith.constant 0 : index
    %115 = vector.load %arg3[%c0_128, %c0_129, %c1_130, %c0_131, %c0_132] : memref<1x4x4x32x16xbf16, #tpu.memory_space<vmem>>, vector<1x1x1x32x16xbf16>
    %116 = vector.shape_cast %115 : vector<1x1x1x32x16xbf16> to vector<32x16xbf16>
    %cst_133 = arith.constant dense<0.000000e+00> : vector<64x16xf32>
    %117 = tpu.matmul %114, %116, %cst_133 {dimension_numbers = #tpu.dot_dimension_numbers<[1], [0], [0], [1], [0, 0, 1, 1], [], []>} : vector<64x32xbf16>, vector<32x16xbf16>, vector<64x16xf32> -> vector<64x16xf32>
    %118 = arith.addf %110, %117 : vector<64x16xf32>
    %c0_134 = arith.constant 0 : index
    %c0_135 = arith.constant 0 : index
    %c2_136 = arith.constant 2 : index
    %c0_137 = arith.constant 0 : index
    %c0_138 = arith.constant 0 : index
    %119 = vector.load %arg3[%c0_134, %c0_135, %c2_136, %c0_137, %c0_138] : memref<1x4x4x32x16xbf16, #tpu.memory_space<vmem>>, vector<1x1x1x32x16xbf16>
    %120 = vector.shape_cast %119 : vector<1x1x1x32x16xbf16> to vector<32x16xbf16>
    %cst_139 = arith.constant dense<0.000000e+00> : vector<64x16xf32>
    %121 = tpu.matmul %114, %120, %cst_139 {dimension_numbers = #tpu.dot_dimension_numbers<[1], [0], [0], [1], [0, 0, 1, 1], [], []>} : vector<64x32xbf16>, vector<32x16xbf16>, vector<64x16xf32> -> vector<64x16xf32>
    %122 = arith.addf %102, %121 : vector<64x16xf32>
    %c2_i32_140 = arith.constant 2 : i32
    %123 = arith.addi %0, %c2_i32_140 : i32
    %c0_141 = arith.constant 0 : index
    %124 = arith.index_cast %123 : i32 to index
    %c2_142 = arith.constant 2 : index
    %c0_143 = arith.constant 0 : index
    %125 = vector.load %arg5[%c0_141, %124, %c2_142, %c0_143] : memref<1x18x18x32xbf16, #tpu.memory_space<vmem>>, vector<1x4x16x32xbf16>
    %126 = vector.shape_cast %125 : vector<1x4x16x32xbf16> to vector<64x32xbf16>
    %c0_144 = arith.constant 0 : index
    %c0_145 = arith.constant 0 : index
    %c0_146 = arith.constant 0 : index
    %c0_147 = arith.constant 0 : index
    %c0_148 = arith.constant 0 : index
    %127 = vector.load %arg3[%c0_144, %c0_145, %c0_146, %c0_147, %c0_148] : memref<1x4x4x32x16xbf16, #tpu.memory_space<vmem>>, vector<1x1x1x32x16xbf16>
    %128 = vector.shape_cast %127 : vector<1x1x1x32x16xbf16> to vector<32x16xbf16>
    %cst_149 = arith.constant dense<0.000000e+00> : vector<64x16xf32>
    %129 = tpu.matmul %126, %128, %cst_149 {dimension_numbers = #tpu.dot_dimension_numbers<[1], [0], [0], [1], [0, 0, 1, 1], [], []>} : vector<64x32xbf16>, vector<32x16xbf16>, vector<64x16xf32> -> vector<64x16xf32>
    %130 = arith.addf %122, %129 : vector<64x16xf32>
    %131 = vector.shape_cast %78 : vector<64x16xf32> to vector<1x4x16x16xf32>
    %c0_150 = arith.constant 0 : index
    %c0_151 = arith.constant 0 : index
    %c0_152 = arith.constant 0 : index
    %c0_153 = arith.constant 0 : index
    %c0_154 = arith.constant 0 : index
    %132 = vector.load %arg4[%c0_150, %c0_151, %c0_152, %c0_153, %c0_154] : memref<1x4x4x16x16xf32, #tpu.memory_space<vmem>>, vector<1x1x4x16x16xf32>
    %133 = vector.shape_cast %132 : vector<1x1x4x16x16xf32> to vector<1x4x16x16xf32>
    %134 = vector.shape_cast %131 : vector<1x4x16x16xf32> to vector<1x1x4x16x16xf32>
    tpu.vector_store %arg4[%c0_150, %c0_151, %c0_152, %c0_153, %c0_154], %134 {strides = array<i32>} : memref<1x4x4x16x16xf32, #tpu.memory_space<vmem>>, vector<1x1x4x16x16xf32>,
    %135 = vector.shape_cast %98 : vector<64x16xf32> to vector<1x4x16x16xf32>
    %c0_155 = arith.constant 0 : index
    %c1_156 = arith.constant 1 : index
    %c0_157 = arith.constant 0 : index
    %c0_158 = arith.constant 0 : index
    %c0_159 = arith.constant 0 : index
    %136 = vector.load %arg4[%c0_155, %c1_156, %c0_157, %c0_158, %c0_159] : memref<1x4x4x16x16xf32, #tpu.memory_space<vmem>>, vector<1x1x4x16x16xf32>
    %137 = vector.shape_cast %136 : vector<1x1x4x16x16xf32> to vector<1x4x16x16xf32>
    %138 = vector.shape_cast %135 : vector<1x4x16x16xf32> to vector<1x1x4x16x16xf32>
    tpu.vector_store %arg4[%c0_155, %c1_156, %c0_157, %c0_158, %c0_159], %138 {strides = array<i32>} : memref<1x4x4x16x16xf32, #tpu.memory_space<vmem>>, vector<1x1x4x16x16xf32>,
    %139 = vector.shape_cast %118 : vector<64x16xf32> to vector<1x4x16x16xf32>
    %c0_160 = arith.constant 0 : index
    %c2_161 = arith.constant 2 : index
    %c0_162 = arith.constant 0 : index
    %c0_163 = arith.constant 0 : index
    %c0_164 = arith.constant 0 : index
    %140 = vector.load %arg4[%c0_160, %c2_161, %c0_162, %c0_163, %c0_164] : memref<1x4x4x16x16xf32, #tpu.memory_space<vmem>>, vector<1x1x4x16x16xf32>
    %141 = vector.shape_cast %140 : vector<1x1x4x16x16xf32> to vector<1x4x16x16xf32>
    %142 = vector.shape_cast %139 : vector<1x4x16x16xf32> to vector<1x1x4x16x16xf32>
    tpu.vector_store %arg4[%c0_160, %c2_161, %c0_162, %c0_163, %c0_164], %142 {strides = array<i32>} : memref<1x4x4x16x16xf32, #tpu.memory_space<vmem>>, vector<1x1x4x16x16xf32>,
    %143 = vector.shape_cast %130 : vector<64x16xf32> to vector<1x4x16x16xf32>
    %c0_165 = arith.constant 0 : index
    %c3_166 = arith.constant 3 : index
    %c0_167 = arith.constant 0 : index
    %c0_168 = arith.constant 0 : index
    %c0_169 = arith.constant 0 : index
    %144 = vector.load %arg4[%c0_165, %c3_166, %c0_167, %c0_168, %c0_169] : memref<1x4x4x16x16xf32, #tpu.memory_space<vmem>>, vector<1x1x4x16x16xf32>
    %145 = vector.shape_cast %144 : vector<1x1x4x16x16xf32> to vector<1x4x16x16xf32>
    %146 = vector.shape_cast %143 : vector<1x4x16x16xf32> to vector<1x1x4x16x16xf32>
    tpu.vector_store %arg4[%c0_165, %c3_166, %c0_167, %c0_168, %c0_169], %146 {strides = array<i32>} : memref<1x4x4x16x16xf32, #tpu.memory_space<vmem>>, vector<1x1x4x16x16xf32>,
    return
  }
  func.func @transform_0(%arg0: i32, %arg1: i32) -> (i32, i32, i32, i32) {
    %c0_i32 = arith.constant 0 : i32
    %c0_i32_0 = arith.constant 0 : i32
    %c0_i32_1 = arith.constant 0 : i32
    %c0_i32_2 = arith.constant 0 : i32
    %c0_i32_3 = arith.constant 0 : i32
    return %c0_i32, %c0_i32_0, %c0_i32_1, %c0_i32_2 : i32, i32, i32, i32
  }
  func.func @transform_1(%arg0: i32, %arg1: i32) -> (i32, i32, i32, i32, i32) {
    %c0_i32 = arith.constant 0 : i32
    %c0_i32_0 = arith.constant 0 : i32
    %c0_i32_1 = arith.constant 0 : i32
    %c0_i32_2 = arith.constant 0 : i32
    %c0_i32_3 = arith.constant 0 : i32
    return %arg0, %c0_i32, %c0_i32_0, %c0_i32_1, %c0_i32_2 : i32, i32, i32, i32, i32
  }
  func.func @transform_2(%arg0: i32, %arg1: i32) -> (i32, i32, i32, i32, i32) {
    %c0_i32 = arith.constant 0 : i32
    %c0_i32_0 = arith.constant 0 : i32
    %c0_i32_1 = arith.constant 0 : i32
    %c0_i32_2 = arith.constant 0 : i32
    return %c0_i32, %c0_i32_0, %arg1, %c0_i32_1, %arg0 : i32, i32, i32, i32, i32
  }
}

</mosaic_0001>

<llo_original>
// kernel: tpu_custom_call.1
$region0: #{tpu_custom_call.1}
  #allocation0 [shape = 'u32[]', space=smem, size = 0x4, offset = 0x4, fixed_abs, tag = 'smem constant byte address 0x4 - core index']
  #allocation1 [shape = 'u32[72,128]{1,0:T(1,128)}', space=vmem, size = 0x9000, scoped, tag = 'internal scratch']
  #allocation2 [shape = 'bf16[1,18,18,32]{3,2,1,0:T(8,128)(2,1)}', space=vmem, size = 0x1b000, scoped, tag = 'scratch operand']
  #allocation5 [shape = 's32[]', space=sflag, size = 0x4, offset = 0, fixed_abs, tag = 'sflag constant byte address 0x0 - dummy sync flag']
  %s0 = inlined_call_operand.vmem [shape: f32[1,16,16,32], index: 0, kind: input, shape index: {}]
  %s1 = inlined_call_operand.vmem [shape: bf16[1,4,4,32,16], index: 1, kind: input, shape index: {}]
  %s2 = inlined_call_operand.hbm [shape: f32[1,4,16,16,16], index: 2, kind: output, shape index: {}]
  %s3 = sld [smem:[#allocation0]]
  $region57: #{tpu_custom_call.1} parent=0
    _
  %s5 = ssub.s32 1, %s3
  %s6 = scalar_select 0, %s5, %s3
  $region1: #{tpu_custom_call.1} parent=0
    #allocation3 [shape = 'u8[262144]{0}', space=vmem, size = 0x40000, scoped, tag = 'output window, operand 0']
    #allocation4 [shape = 's32[2]{0}', space=sflag, size = 0x8, scoped, tag = 'scoped memory for tpu_custom_call.1']
    %7 = vsyncpa [#allocation4], 0
    %s8 = scalar_lea.sflag [#allocation4], 1
    %9 = vsyncpa %s8, 0
    loop: start=0, step=1, limit=6
    $region2: #{tpu_custom_call.1} parent=1 // loop_pre_header
      _
    $region3: #{tpu_custom_call.1} parent=1 // loop_header
      %s11 = sphi 0, %s15
      %p12 = scmp.ge.s32.totalorder %s11, 6
      %s18 = sphi 0, %s30
      %s19 = sphi 0, %s26
      %s20 = sphi 0, %s18
      %s21 = sphi 0, %s19
      %s22 = sphi 0, %s20
      %s23 = sphi 0, %s21
      %s31 = sphi 0, %s31
      %s33 = sphi 0, %s31
      %s34 = sphi 0, %s33
      %s48 = sphi 0, %s34
      %s54 = sphi 0, %s56
      %s57 = sphi 0, %s54
      %s58 = sphi 0, %s57
      %s74 = sphi 0, %s58
      %s82 = sphi 0, %s84
      %s85 = sphi 0, %s82
      %s86 = sphi 0, %s85
      %s102 = sphi 0, %s86
    $region4: #{tpu_custom_call.1} parent=1 // loop_header_branch
      %14 = sbr.rel (%p12) target = $region8
    $region5: #{tpu_custom_call.1} parent=1 // loop_body
      %s16 = ssub.s32 %s11, 1
      %s17 = ssub.s32 %s11, 2
      %s24 = sadd.s32 1, %s19
      %p25 = scmp.ge.s32.totalorder %s24, 4
      %s26 = scalar_select %p25, 0, %s24
      %s27 = sadd.s32 1, %s18
      %s28 = scalar_select %p25, %s27, %s18
      %p29 = scmp.ge.s32.totalorder %s28, 1
      %s30 = scalar_select %p29, 0, %s28
      %s32 = sadd.s32 %s31, 1
      %p35 = scmp.eq.s32.totalorder %s11, 3
      %p36 = scmp.ne.s32.totalorder %s31, %s33
      %p37 = scmp.eq.s32.totalorder %s11, 0
      %p38 = por %p36, %p37
      %p39 = scmp.ne.s32.totalorder %s31, %s33
      %p40 = scmp.eq.s32.totalorder %s16, 3
      %p41 = por %p39, %p40
      %p42 = scmp.ne.s32.totalorder %s33, %s34
      %p43 = scmp.eq.s32.totalorder %s16, 0
      %p44 = por %p42, %p43
      %p45 = scmp.ne.s32.totalorder %s33, %s34
      %p46 = scmp.eq.s32.totalorder %s17, 3
      %p47 = por %p45, %p46
      %p49 = scmp.ne.s32.totalorder %s34, %s48
      %p50 = scmp.eq.s32.totalorder %s17, 0
      %p51 = por %p49, %p50
      %s52 = ssub.s32 %s18, %s30
      %p53 = scmp.eq.s32.totalorder %s52, 0
      %s55 = sadd.s32 %s54, 1
      %s56 = scalar_select %p53, %s54, %s55
      %p59 = pneg %p53
      %p60 = scmp.eq.s32.totalorder %s11, 3
      %p61 = por %p59, %p60
      %p62 = scmp.ne.s32.totalorder %s54, %s57
      %p63 = scmp.eq.s32.totalorder %s11, 0
      %p64 = por %p62, %p63
      %p65 = scmp.ne.s32.totalorder %s54, %s57
      %p66 = scmp.eq.s32.totalorder %s16, 3
      %p67 = por %p65, %p66
      %p68 = scmp.ne.s32.totalorder %s57, %s58
      %p69 = scmp.eq.s32.totalorder %s16, 0
      %p70 = por %p68, %p69
      %p71 = scmp.ne.s32.totalorder %s57, %s58
      %p72 = scmp.eq.s32.totalorder %s17, 3
      %p73 = por %p71, %p72
      %p75 = scmp.ne.s32.totalorder %s58, %s74
      %p76 = scmp.eq.s32.totalorder %s17, 0
      %p77 = por %p75, %p76
      %s78 = ssub.s32 %s19, %s26
      %s79 = ssub.s32 %s18, %s30
      %s80 = sor.u32 %s78, %s79
      %p81 = scmp.eq.s32.totalorder %s80, 0
      %s83 = sadd.s32 %s82, 1
      %s84 = scalar_select %p81, %s82, %s83
      %p87 = pneg %p81
      %p88 = scmp.eq.s32.totalorder %s11, 3
      %p89 = por %p87, %p88
      %p90 = scmp.ne.s32.totalorder %s82, %s85
      %p91 = scmp.eq.s32.totalorder %s11, 0
      %p92 = por %p90, %p91
      %p93 = scmp.ne.s32.totalorder %s82, %s85
      %p94 = scmp.eq.s32.totalorder %s16, 3
      %p95 = por %p93, %p94
      %p96 = scmp.ne.s32.totalorder %s85, %s86
      %p97 = scmp.eq.s32.totalorder %s16, 0
      %p98 = por %p96, %p97
      %p99 = scmp.ne.s32.totalorder %s85, %s86
      %p100 = scmp.eq.s32.totalorder %s17, 3
      %p101 = por %p99, %p100
      %p103 = scmp.ne.s32.totalorder %s86, %s102
      %p104 = scmp.eq.s32.totalorder %s17, 0
      %p105 = por %p103, %p104
      %p106 = scmp.le.s32.totalorder 1, %s11
      %p107 = scmp.lt.s32.totalorder %s11, 5
      %p108 = pnand %p106, %p107
      %p109 = pneg %p108
      // Predicated region
      $region9: #{tpu_custom_call.1} parent=5 // pred_check
        _
      $region10: #{tpu_custom_call.1} parent=5 // pred_check_branch
        %111 = sbr.rel (%p108) target = $region12
      $region11: #{tpu_custom_call.1} parent=5 // pred_region
        %s112 = ssub.s32 %s11, 1
        // Predicated region
        $region13: #{tpu_custom_call.1} parent=11 // pred_check
          %p113 = pneg %p44
        $region14: #{tpu_custom_call.1} parent=11 // pred_check_branch
          %115 = sbr.rel (%p113) target = $region16
        $region15: #{tpu_custom_call.1} parent=11 // pred_region
          _
        $region16: #{tpu_custom_call.1} parent=11 // pred_fallthru
          _
        // Predicated region
        $region17: #{tpu_custom_call.1} parent=11 // pred_check
          %p116 = pneg %p70
        $region18: #{tpu_custom_call.1} parent=11 // pred_check_branch
          %118 = sbr.rel (%p116) target = $region20
        $region19: #{tpu_custom_call.1} parent=11 // pred_region
          %p119 = scmp.lt.s32.totalorder %s20, 0
          %s120 = scalar_select %p119, %s20, 0
          %s121 = smul.addr %s120, 64
          %s122 = smul.addr %s121, 4
          %s123 = scalar_lea.vmem %s1, %s122
        $region20: #{tpu_custom_call.1} parent=11 // pred_fallthru
          _
      $region12: #{tpu_custom_call.1} parent=5 // pred_fallthru
        _
      %p124 = scmp.lt.s32.totalorder %s11, 4
      // Predicated region
      $region21: #{tpu_custom_call.1} parent=5 // pred_check
        %p125 = pneg %p124
      $region22: #{tpu_custom_call.1} parent=5 // pred_check_branch
        %127 = sbr.rel (%p125) target = $region24
      $region23: #{tpu_custom_call.1} parent=5 // pred_region
        _
      $region24: #{tpu_custom_call.1} parent=5 // pred_fallthru
        _
      %p128 = scmp.le.s32.totalorder 1, %s11
      %p129 = scmp.lt.s32.totalorder %s11, 5
      %p130 = pnand %p128, %p129
      %p131 = pneg %p130
      // Predicated region
      $region25: #{tpu_custom_call.1} parent=5 // pred_check
        _
      $region26: #{tpu_custom_call.1} parent=5 // pred_check_branch
        %133 = sbr.rel (%p130) target = $region28
      $region27: #{tpu_custom_call.1} parent=5 // pred_region
        %s134 = ssub.s32 %s11, 1
        %p135 = pneg %p44
        %p136 = pneg %p41
        %p137 = scmp.lt.s32.totalorder %s20, 0
        %s138 = scalar_select %p137, %s20, 0
        %s139 = smul.addr %s138, 64
        %s140 = smul.addr %s139, 4
        %s141 = scalar_lea.vmem %s1, %s140
        %p142 = pneg %p70
        %p143 = pneg %p67
        %p144 = pneg %p98
        %p145 = pneg %p95
        %s146 = sand.u32 %s85, 1
        %s147 = scalar_lea.sflag [#allocation4], %s146
        %s148 = sand.u32 %s85, 1
        %s149 = smul.addr %s148, 256
        %s150 = scalar_lea.vmem [#allocation3], %s149
        %p151 = scmp.lt.s32.totalorder %s20, 0
        %s152 = scalar_select %p151, %s20, 0
        %s153 = smul.addr %s152, 64
        %s154 = smul.addr %s153, 4
        %s155 = scalar_lea.vmem %s1, %s154
        %s156 = smul.u32 4, %s21
        %s158 = smul.u32 %s21, 4
        %p159 = scmp.eq.s32.totalorder %s21, 0
        // Predicated region
        $region29: #{tpu_custom_call.1} parent=27 // pred_check
          %p160 = pneg %p159
        $region30: #{tpu_custom_call.1} parent=27 // pred_check_branch
          %162 = sbr.rel (%p160) target = $region32
        $region31: #{tpu_custom_call.1} parent=27 // pred_region
          %vm163 = vcmask 257024
          %164 = vst.msk [vmem:[#allocation2] sm:$0xf] %vm163, 0
          %165 = vst.msk [vmem:[#allocation2 + $0x4] sm:$0xf] %vm163, 0
          %vm166 = vcmask 253952
          %167 = vst.msk [vmem:[#allocation2 + $0x8] sm:$0x1] %vm166, 0
        $region32: #{tpu_custom_call.1} parent=27 // pred_fallthru
          _
        %p168 = scmp.eq.s32.totalorder %s21, 3
        // Predicated region
        $region33: #{tpu_custom_call.1} parent=27 // pred_check
          %p169 = pneg %p168
        $region34: #{tpu_custom_call.1} parent=27 // pred_check_branch
          %171 = sbr.rel (%p169) target = $region36
        $region35: #{tpu_custom_call.1} parent=27 // pred_region
          %s172 = scalar_lea.vmem [#allocation2], 204
          %vm173 = vcmask 257024
          %174 = vst.msk [vmem:[%s172] sm:$0xf] %vm173, 0
          %175 = vst.msk [vmem:[%s172 + $0x4] sm:$0xf] %vm173, 0
          %vm176 = vcmask 253952
          %177 = vst.msk [vmem:[%s172 + $0x8] sm:$0x1] %vm176, 0
        $region36: #{tpu_custom_call.1} parent=27 // pred_fallthru
          _
        %s178 = smul.u32 %s158, 3
        %s179 = smul.addr %s178, 4
        %s180 = scalar_lea.vmem [#allocation2], %s179
        %vm181 = vcmask 253952
        %vm182 = vsmask.f32 256
        %vm183 = vmand %vm181, %vm182
        %v184 = vld [vmem:[%s180] sm:$0x1]
        %v185 = vsel %vm183, 0, %v184
        %186 = vst [vmem:[%s180] sm:$0x1] %v185
        %v187 = vld [vmem:[%s180 + $0xc] sm:$0x1]
        %v188 = vsel %vm183, 0, %v187
        %189 = vst [vmem:[%s180 + $0xc] sm:$0x1] %v188
        %v190 = vld [vmem:[%s180 + $0x18] sm:$0x1]
        %v191 = vsel %vm183, 0, %v190
        %192 = vst [vmem:[%s180 + $0x18] sm:$0x1] %v191
        %v193 = vld [vmem:[%s180 + $0x24] sm:$0x1]
        %v194 = vsel %vm183, 0, %v193
        %195 = vst [vmem:[%s180 + $0x24] sm:$0x1] %v194
        %v196 = vld [vmem:[%s180 + $0x30] sm:$0x1]
        %v197 = vsel %vm183, 0, %v196
        %198 = vst [vmem:[%s180 + $0x30] sm:$0x1] %v197
        %v199 = vld [vmem:[%s180 + $0x3c] sm:$0x1]
        %v200 = vsel %vm183, 0, %v199
        %201 = vst [vmem:[%s180 + $0x3c] sm:$0x1] %v200
        %vm202 = vsmask.f32 7938
        %vm203 = vmand %vm181, %vm202
        %v204 = vld [vmem:[%s180 + $0x8] sm:$0x1]
        %v205 = vsel %vm203, 0, %v204
        %206 = vst [vmem:[%s180 + $0x8] sm:$0x1] %v205
        %v207 = vld [vmem:[%s180 + $0x14] sm:$0x1]
        %v208 = vsel %vm203, 0, %v207
        %209 = vst [vmem:[%s180 + $0x14] sm:$0x1] %v208
        %v210 = vld [vmem:[%s180 + $0x20] sm:$0x1]
        %v211 = vsel %vm203, 0, %v210
        %212 = vst [vmem:[%s180 + $0x20] sm:$0x1] %v211
        %v213 = vld [vmem:[%s180 + $0x2c] sm:$0x1]
        %v214 = vsel %vm203, 0, %v213
        %215 = vst [vmem:[%s180 + $0x2c] sm:$0x1] %v214
        %v216 = vld [vmem:[%s180 + $0x38] sm:$0x1]
        %v217 = vsel %vm203, 0, %v216
        %218 = vst [vmem:[%s180 + $0x38] sm:$0x1] %v217
        %v219 = vld [vmem:[%s180 + $0x44] sm:$0x1]
        %v220 = vsel %vm203, 0, %v219
        %221 = vst [vmem:[%s180 + $0x44] sm:$0x1] %v220
        %s222 = smul.u32 %s158, 16
        %s223 = scalar_lea.vmem %s0, %s222
        %v224 = vld [vmem:[%s223] sm:$0xff]
        %v225 = vld [vmem:[%s223 + $0x8] sm:$0xff]
        %v226 = vld [vmem:[%s223 + $0x10] sm:$0xff]
        %v227 = vld [vmem:[%s223 + $0x18] sm:$0xff]
        %v228 = vld [vmem:[%s223 + $0x20] sm:$0xff]
        %v229 = vld [vmem:[%s223 + $0x28] sm:$0xff]
        %v230 = vld [vmem:[%s223 + $0x30] sm:$0xff]
        %v231 = vld [vmem:[%s223 + $0x38] sm:$0xff]
        %v232 = vmax.f32 %v224, 0.0
        %v233 = vmax.f32 %v225, 0.0
        %v234 = vmax.f32 %v226, 0.0
        %v235 = vmax.f32 %v227, 0.0
        %v236 = vmax.f32 %v228, 0.0
        %v237 = vmax.f32 %v229, 0.0
        %v238 = vmax.f32 %v230, 0.0
        %v239 = vmax.f32 %v231, 0.0
        %v240 = vpack.c.bf16 %v232, %v232
        %v241 = vpack.c.bf16 %v233, %v233
        %v242 = vpack.c.bf16 %v234, %v234
        %v243 = vpack.c.bf16 %v235, %v235
        %v244 = vpack.c.bf16 %v236, %v236
        %v245 = vpack.c.bf16 %v237, %v237
        %v246 = vpack.c.bf16 %v238, %v238
        %v247 = vpack.c.bf16 %v239, %v239
        %s248 = sadd.s32 %s158, 1
        %vm249 = vsmask.f32 4368
        %vm250 = vmor %vm182, %vm249
        %v252 = vshrl.u32 %v240, 16
        %v254 = vrot.slane %v252, 7
        %v255 = vshll.u32 %v240, 16
        %v257 = vor.u32 %v254, %v255
        %v258 = vrot.slane %v254, 4
        %v260 = vshrl.u32 %v241, 16
        %v262 = vrot.slane %v260, 7
        %v263 = vshll.u32 %v241, 16
        %v265 = vor.u32 %v262, %v263
        %v266 = vsel %vm250, %v258, %v265
        %v267 = vrot.slane %v262, 4
        %v269 = vshrl.u32 %v242, 16
        %v271 = vrot.slane %v269, 7
        %v272 = vshll.u32 %v242, 16
        %v274 = vor.u32 %v271, %v272
        %v275 = vrot.slane %v271, 4
        %v277 = vshrl.u32 %v243, 16
        %v279 = vrot.slane %v277, 7
        %v280 = vshll.u32 %v243, 16
        %v282 = vor.u32 %v279, %v280
        %v283 = vsel %vm250, %v275, %v282
        %v284 = vrot.slane %v279, 4
        %v286 = vshrl.u32 %v244, 16
        %v288 = vrot.slane %v286, 7
        %v289 = vshll.u32 %v244, 16
        %v291 = vor.u32 %v288, %v289
        %v292 = vrot.slane %v288, 4
        %v294 = vshrl.u32 %v245, 16
        %v296 = vrot.slane %v294, 7
        %v297 = vshll.u32 %v245, 16
        %v299 = vor.u32 %v296, %v297
        %v300 = vsel %vm250, %v292, %v299
        %v301 = vrot.slane %v296, 4
        %v303 = vshrl.u32 %v246, 16
        %v305 = vrot.slane %v303, 7
        %v306 = vshll.u32 %v246, 16
        %v308 = vor.u32 %v305, %v306
        %v309 = vrot.slane %v305, 4
        %v311 = vshrl.u32 %v247, 16
        %v313 = vrot.slane %v311, 7
        %v314 = vshll.u32 %v247, 16
        %v316 = vor.u32 %v313, %v314
        %v317 = vsel %vm250, %v309, %v316
        %v318 = vrot.slane %v313, 4
        %s331 = smul.u32 %s248, 3
        %s332 = smul.addr %s331, 4
        %s333 = scalar_lea.vmem [#allocation2], %s332
        %vm334 = vcmask 257024
        %vm335 = vmand %vm334, %vm202
        %v336 = vld [vmem:[%s333] sm:$0xf]
        %v337 = vsel %vm335, %v257, %v336
        %338 = vst [vmem:[%s333] sm:$0xf] %v337
        %vm339 = vcmask 257024
        %340 = vst.msk [vmem:[%s333 + $0x4] sm:$0xf] %vm339, %v266
        %v341 = vld [vmem:[%s333 + $0x8] sm:$0x1]
        %v342 = vsel %vm183, %v267, %v341
        %343 = vst [vmem:[%s333 + $0x8] sm:$0x1] %v342
        %v344 = vld [vmem:[%s333 + $0xc] sm:$0xf]
        %v345 = vsel %vm335, %v274, %v344
        %346 = vst [vmem:[%s333 + $0xc] sm:$0xf] %v345
        %347 = vst.msk [vmem:[%s333 + $0x10] sm:$0xf] %vm339, %v283
        %v348 = vld [vmem:[%s333 + $0x14] sm:$0x1]
        %v349 = vsel %vm183, %v284, %v348
        %350 = vst [vmem:[%s333 + $0x14] sm:$0x1] %v349
        %v351 = vld [vmem:[%s333 + $0x18] sm:$0xf]
        %v352 = vsel %vm335, %v291, %v351
        %353 = vst [vmem:[%s333 + $0x18] sm:$0xf] %v352
        %354 = vst.msk [vmem:[%s333 + $0x1c] sm:$0xf] %vm339, %v300
        %v355 = vld [vmem:[%s333 + $0x20] sm:$0x1]
        %v356 = vsel %vm183, %v301, %v355
        %357 = vst [vmem:[%s333 + $0x20] sm:$0x1] %v356
        %v358 = vld [vmem:[%s333 + $0x24] sm:$0xf]
        %v359 = vsel %vm335, %v308, %v358
        %360 = vst [vmem:[%s333 + $0x24] sm:$0xf] %v359
        %361 = vst.msk [vmem:[%s333 + $0x28] sm:$0xf] %vm339, %v317
        %v362 = vld [vmem:[%s333 + $0x2c] sm:$0x1]
        %v363 = vsel %vm183, %v318, %v362
        %364 = vst [vmem:[%s333 + $0x2c] sm:$0x1] %v363
        %p365 = scmp.gt.s32.totalorder %s21, 0
        // Predicated region
        $region37: #{tpu_custom_call.1} parent=27 // pred_check
          %p366 = pneg %p365
        $region38: #{tpu_custom_call.1} parent=27 // pred_check_branch
          %368 = sbr.rel (%p366) target = $region40
        $region39: #{tpu_custom_call.1} parent=27 // pred_region
          %s369 = ssub.s32 %s158, 1
          %s370 = smul.u32 %s369, 16
          %s371 = scalar_lea.vmem %s0, %s370
          %v372 = vld [vmem:[%s371] sm:$0xff]
          %v373 = vld [vmem:[%s371 + $0x8] sm:$0xff]
          %v374 = vmax.f32 %v372, 0.0
          %v375 = vmax.f32 %v373, 0.0
          %v376 = vpack.c.bf16 %v374, %v374
          %v377 = vpack.c.bf16 %v375, %v375
          %v379 = vshrl.u32 %v376, 16
          %v381 = vrot.slane %v379, 7
          %v382 = vshll.u32 %v376, 16
          %v384 = vor.u32 %v381, %v382
          %v385 = vrot.slane %v381, 4
          %v387 = vshrl.u32 %v377, 16
          %v389 = vrot.slane %v387, 7
          %v390 = vshll.u32 %v377, 16
          %v392 = vor.u32 %v389, %v390
          %v393 = vsel %vm250, %v385, %v392
          %v394 = vrot.slane %v389, 4
          %v398 = vld [vmem:[%s180] sm:$0xf]
          %v399 = vsel %vm335, %v384, %v398
          %400 = vst [vmem:[%s180] sm:$0xf] %v399
          %401 = vst.msk [vmem:[%s180 + $0x4] sm:$0xf] %vm339, %v393
          %v402 = vld [vmem:[%s180 + $0x8] sm:$0x1]
          %v403 = vsel %vm183, %v394, %v402
          %404 = vst [vmem:[%s180 + $0x8] sm:$0x1] %v403
        $region40: #{tpu_custom_call.1} parent=27 // pred_fallthru
          _
        %p405 = scmp.lt.s32.totalorder %s21, 3
        // Predicated region
        $region41: #{tpu_custom_call.1} parent=27 // pred_check
          %p406 = pneg %p405
        $region42: #{tpu_custom_call.1} parent=27 // pred_check_branch
          %408 = sbr.rel (%p406) target = $region44
        $region43: #{tpu_custom_call.1} parent=27 // pred_region
          %s409 = sadd.s32 %s158, 4
          %s410 = smul.u32 %s409, 16
          %s411 = scalar_lea.vmem %s0, %s410
          %v412 = vld [vmem:[%s411] sm:$0xff]
          %v413 = vld [vmem:[%s411 + $0x8] sm:$0xff]
          %v414 = vmax.f32 %v412, 0.0
          %v415 = vmax.f32 %v413, 0.0
          %v416 = vpack.c.bf16 %v414, %v414
          %v417 = vpack.c.bf16 %v415, %v415
          %s418 = sadd.s32 %s158, 5
          %v420 = vshrl.u32 %v416, 16
          %v422 = vrot.slane %v420, 7
          %v423 = vshll.u32 %v416, 16
          %v425 = vor.u32 %v422, %v423
          %v426 = vrot.slane %v422, 4
          %v428 = vshrl.u32 %v417, 16
          %v430 = vrot.slane %v428, 7
          %v431 = vshll.u32 %v417, 16
          %v433 = vor.u32 %v430, %v431
          %v434 = vsel %vm250, %v426, %v433
          %v435 = vrot.slane %v430, 4
          %s439 = smul.u32 %s418, 3
          %s440 = smul.addr %s439, 4
          %s441 = scalar_lea.vmem [#allocation2], %s440
          %v442 = vld [vmem:[%s441] sm:$0xf]
          %v443 = vsel %vm335, %v425, %v442
          %444 = vst [vmem:[%s441] sm:$0xf] %v443
          %445 = vst.msk [vmem:[%s441 + $0x4] sm:$0xf] %vm339, %v434
          %v446 = vld [vmem:[%s441 + $0x8] sm:$0x1]
          %v447 = vsel %vm183, %v435, %v446
          %448 = vst [vmem:[%s441 + $0x8] sm:$0x1] %v447
        $region44: #{tpu_custom_call.1} parent=27 // pred_fallthru
          _
        %v449 = vld [vmem:[%s180] sm:$0xf]
        %v450 = vld [vmem:[%s180 + $0x4] sm:$0xf]
        %v451 = vld [vmem:[%s180 + $0xc] sm:$0xf]
        %v452 = vld [vmem:[%s180 + $0x10] sm:$0xf]
        %v453 = vld [vmem:[%s180 + $0x18] sm:$0xf]
        %v454 = vld [vmem:[%s180 + $0x1c] sm:$0xf]
        %v455 = vld [vmem:[%s180 + $0x24] sm:$0xf]
        %v456 = vld [vmem:[%s180 + $0x28] sm:$0xf]
        %s457 = scalar_lea.vmem %s155, 240
        %v458 = vld [vmem:[%s457] sm:$0xf]
        %v459 = vld [vmem:[%s457 + $0x4] sm:$0xf]
        %v460 = vld [vmem:[%s457 + $0x8] sm:$0xf]
        %v461 = vld [vmem:[%s457 + $0xc] sm:$0xf]
        %v462 = vld [vmem:[%s180 + $0x8] sm:$0x1]
        %v463 = vld [vmem:[%s180 + $0x14] sm:$0x1]
        %v464 = vld [vmem:[%s180 + $0x20] sm:$0x1]
        %v465 = vld [vmem:[%s180 + $0x2c] sm:$0x1]
        %vm466 = vsmask.f32 3328
        %vm467 = vsmask.f32 7440
        %vm468 = vmor %vm466, %vm467
        %v470 = vshrl.u32 %v449, 16
        %v472 = vrot.slane %v470, 4
        %v473 = vshll.u32 %v449, 16
        %v475 = vrot.slane %v473, 5
        %v476 = vor.u32 %v472, %v475
        %v477 = vrot.slane %v476, 4
        %v479 = vshll.u32 %v450, 16
        %v481 = vrot.slane %v479, 5
        %v482 = vsel %vm468, %v477, %v481
        %v483 = vshrl.u32 %v450, 16
        %v485 = vrot.slane %v483, 4
        %v486 = vor.u32 %v485, %v481
        %v487 = vrot.slane %v486, 4
        %v489 = vshll.u32 %v462, 16
        %v491 = vrot.slane %v489, 5
        %v492 = vsel %vm468, %v487, %v491
        %v494 = vshrl.u32 %v451, 16
        %v496 = vrot.slane %v494, 4
        %v497 = vshll.u32 %v451, 16
        %v499 = vrot.slane %v497, 5
        %v500 = vor.u32 %v496, %v499
        %v501 = vrot.slane %v500, 4
        %v503 = vshll.u32 %v452, 16
        %v505 = vrot.slane %v503, 5
        %v506 = vsel %vm468, %v501, %v505
        %v507 = vshrl.u32 %v452, 16
        %v509 = vrot.slane %v507, 4
        %v510 = vor.u32 %v509, %v505
        %v511 = vrot.slane %v510, 4
        %v513 = vshll.u32 %v463, 16
        %v515 = vrot.slane %v513, 5
        %v516 = vsel %vm468, %v511, %v515
        %v518 = vshrl.u32 %v453, 16
        %v520 = vrot.slane %v518, 4
        %v521 = vshll.u32 %v453, 16
        %v523 = vrot.slane %v521, 5
        %v524 = vor.u32 %v520, %v523
        %v525 = vrot.slane %v524, 4
        %v527 = vshll.u32 %v454, 16
        %v529 = vrot.slane %v527, 5
        %v530 = vsel %vm468, %v525, %v529
        %v531 = vshrl.u32 %v454, 16
        %v533 = vrot.slane %v531, 4
        %v534 = vor.u32 %v533, %v529
        %v535 = vrot.slane %v534, 4
        %v537 = vshll.u32 %v464, 16
        %v539 = vrot.slane %v537, 5
        %v540 = vsel %vm468, %v535, %v539
        %v542 = vshrl.u32 %v455, 16
        %v544 = vrot.slane %v542, 4
        %v545 = vshll.u32 %v455, 16
        %v547 = vrot.slane %v545, 5
        %v548 = vor.u32 %v544, %v547
        %v549 = vrot.slane %v548, 4
        %v551 = vshll.u32 %v456, 16
        %v553 = vrot.slane %v551, 5
        %v554 = vsel %vm468, %v549, %v553
        %v555 = vshrl.u32 %v456, 16
        %v557 = vrot.slane %v555, 4
        %v558 = vor.u32 %v557, %v553
        %v559 = vrot.slane %v558, 4
        %v561 = vshll.u32 %v465, 16
        %v563 = vrot.slane %v561, 5
        %v564 = vsel %vm468, %v559, %v563
        %s565 = scalar_lea.vmem %s155, 208
        %v566 = vld [vmem:[%s565] sm:$0xf]
        %v567 = vld [vmem:[%s565 + $0x4] sm:$0xf]
        %v568 = vld [vmem:[%s565 + $0x8] sm:$0xf]
        %v569 = vld [vmem:[%s565 + $0xc] sm:$0xf]
        %v570 = vunpack.c.l.b16 %v482
        %v571 = vunpack.c.l.b16 %v492
        %v572 = vunpack.c.l.b16 %v506
        %v573 = vunpack.c.l.b16 %v516
        %v574 = vunpack.c.l.b16 %v530
        %v575 = vunpack.c.l.b16 %v540
        %v576 = vunpack.c.l.b16 %v554
        %v577 = vunpack.c.l.b16 %v564
        %v578 = vpack.c.b16 %v571, %v570
        %v579 = vpack.c.b16 %v573, %v572
        %v580 = vpack.c.b16 %v575, %v574
        %v581 = vpack.c.b16 %v577, %v576
        %v586 = vunpack.c.l.b16 %v566
        %v587 = vunpack.c.l.b16 %v567
        %v588 = vunpack.c.l.b16 %v568
        %v589 = vunpack.c.l.b16 %v569
        %v590 = vpack.c.b16 %v587, %v586
        %v591 = vpack.c.b16 %v589, %v588
        %vm594 = vcmask 261120
        %v596 = vsel %vm594, %v578, 0
        %v599 = vsel %vm594, %v579, 0
        %v602 = vsel %vm594, %v580, 0
        %v605 = vsel %vm594, %v581, 0
        %607 = vmatpush.bf16.msra.mxu0 0
        %608 = vmatpush.bf16.msra.mxu0 0
        %609 = vmatpush.bf16.msra.mxu0 0
        %610 = vmatpush.bf16.msra.mxu0 0
        %611 = vmatpush.bf16.msra.mxu0 0
        %612 = vmatpush.bf16.msra.mxu0 0
        %613 = vmatpush.bf16.msra.mxu0 %v591
        %614 = vmatpush.bf16.msra.mxu0 %v590
        %615 = vmatmul.bf16.gmra.mxu0 %v596
        %v616 = vpop.f32.mrf.mxu0
        %v617 = vadd.f32 0.0, %v616
        %v618 = vpop.f32.mrf.mxu0
        %v619 = vadd.f32 0.0, %v618
        %620 = vmatmul.bf16.gmra.mxu0 %v599
        %v621 = vpop.f32.mrf.mxu0
        %v622 = vadd.f32 0.0, %v621
        %v623 = vpop.f32.mrf.mxu0
        %v624 = vadd.f32 0.0, %v623
        %625 = vmatmul.bf16.gmra.mxu0 %v602
        %v626 = vpop.f32.mrf.mxu0
        %v627 = vadd.f32 0.0, %v626
        %v628 = vpop.f32.mrf.mxu0
        %v629 = vadd.f32 0.0, %v628
        %630 = vmatmul.bf16.gmra.mxu0 %v605
        %v631 = vpop.f32.mrf.mxu0
        %v632 = vadd.f32 0.0, %v631
        %v633 = vpop.f32.mrf.mxu0
        %v634 = vadd.f32 0.0, %v633
        %635 = vdwg.mxu0
        %v644 = vunpack.c.l.b16 %v449
        %v645 = vunpack.c.l.b16 %v450
        %v646 = vunpack.c.l.b16 %v451
        %v647 = vunpack.c.l.b16 %v452
        %v648 = vunpack.c.l.b16 %v453
        %v649 = vunpack.c.l.b16 %v454
        %v650 = vunpack.c.l.b16 %v455
        %v651 = vunpack.c.l.b16 %v456
        %v652 = vpack.c.b16 %v645, %v644
        %v653 = vpack.c.b16 %v647, %v646
        %v654 = vpack.c.b16 %v649, %v648
        %v655 = vpack.c.b16 %v651, %v650
        %v660 = vunpack.c.l.b16 %v458
        %v661 = vunpack.c.l.b16 %v459
        %v662 = vunpack.c.l.b16 %v460
        %v663 = vunpack.c.l.b16 %v461
        %v664 = vpack.c.b16 %v661, %v660
        %v665 = vpack.c.b16 %v663, %v662
        %v669 = vsel %vm594, %v652, 0
        %v672 = vsel %vm594, %v653, 0
        %v675 = vsel %vm594, %v654, 0
        %v678 = vsel %vm594, %v655, 0
        %680 = vmatpush.bf16.msra.mxu0 0
        %681 = vmatpush.bf16.msra.mxu0 0
        %682 = vmatpush.bf16.msra.mxu0 0
        %683 = vmatpush.bf16.msra.mxu0 0
        %684 = vmatpush.bf16.msra.mxu0 0
        %685 = vmatpush.bf16.msra.mxu0 0
        %686 = vmatpush.bf16.msra.mxu0 %v665
        %687 = vmatpush.bf16.msra.mxu0 %v664
        %688 = vmatmul.bf16.gmra.mxu0 %v669
        %v689 = vpop.f32.mrf.mxu0
        %v690 = vadd.f32 %v617, %v689
        %v691 = vpop.f32.mrf.mxu0
        %v692 = vadd.f32 %v619, %v691
        %693 = vmatmul.bf16.gmra.mxu0 %v672
        %v694 = vpop.f32.mrf.mxu0
        %v695 = vadd.f32 %v622, %v694
        %v696 = vpop.f32.mrf.mxu0
        %v697 = vadd.f32 %v624, %v696
        %698 = vmatmul.bf16.gmra.mxu0 %v675
        %v699 = vpop.f32.mrf.mxu0
        %v700 = vadd.f32 %v627, %v699
        %v701 = vpop.f32.mrf.mxu0
        %v702 = vadd.f32 %v629, %v701
        %703 = vmatmul.bf16.gmra.mxu0 %v678
        %v704 = vpop.f32.mrf.mxu0
        %v705 = vadd.f32 %v632, %v704
        %v706 = vpop.f32.mrf.mxu0
        %v707 = vadd.f32 %v634, %v706
        %708 = vdwg.mxu0
        %s709 = scalar_lea.vmem %s155, 224
        %v710 = vld [vmem:[%s709] sm:$0xf]
        %v711 = vld [vmem:[%s709 + $0x4] sm:$0xf]
        %v712 = vld [vmem:[%s709 + $0x8] sm:$0xf]
        %v713 = vld [vmem:[%s709 + $0xc] sm:$0xf]
        %v714 = vld [vmem:[%s180] sm:$0xe]
        %v715 = vld [vmem:[%s180 + $0xc] sm:$0xe]
        %v716 = vld [vmem:[%s180 + $0x18] sm:$0xe]
        %v717 = vld [vmem:[%s180 + $0x24] sm:$0xe]
        %vm726 = vcmask 1042432
        %vm727 = vcmask 1046532
        %vm728 = vmor %vm726, %vm727
        %v729 = vrot.slane %v714, 5
        %v730 = vrot.slane %v729, 4
        %v731 = vrot.slane %v450, 5
        %v732 = vsel %vm728, %v730, %v731
        %v733 = vrot.slane %v731, 4
        %v734 = vrot.slane %v462, 5
        %v735 = vsel %vm728, %v733, %v734
        %v736 = vrot.slane %v715, 5
        %v737 = vrot.slane %v736, 4
        %v738 = vrot.slane %v452, 5
        %v739 = vsel %vm728, %v737, %v738
        %v740 = vrot.slane %v738, 4
        %v741 = vrot.slane %v463, 5
        %v742 = vsel %vm728, %v740, %v741
        %v743 = vrot.slane %v716, 5
        %v744 = vrot.slane %v743, 4
        %v745 = vrot.slane %v454, 5
        %v746 = vsel %vm728, %v744, %v745
        %v747 = vrot.slane %v745, 4
        %v748 = vrot.slane %v464, 5
        %v749 = vsel %vm728, %v747, %v748
        %v750 = vrot.slane %v717, 5
        %v751 = vrot.slane %v750, 4
        %v752 = vrot.slane %v456, 5
        %v753 = vsel %vm728, %v751, %v752
        %v754 = vrot.slane %v752, 4
        %v755 = vrot.slane %v465, 5
        %v756 = vsel %vm728, %v754, %v755
        %s757 = scalar_lea.vmem %s155, 192
        %v758 = vld [vmem:[%s757] sm:$0xf]
        %v759 = vld [vmem:[%s757 + $0x4] sm:$0xf]
        %v760 = vld [vmem:[%s757 + $0x8] sm:$0xf]
        %v761 = vld [vmem:[%s757 + $0xc] sm:$0xf]
        %v762 = vunpack.c.l.b16 %v732
        %v763 = vunpack.c.l.b16 %v735
        %v764 = vunpack.c.l.b16 %v739
        %v765 = vunpack.c.l.b16 %v742
        %v766 = vunpack.c.l.b16 %v746
        %v767 = vunpack.c.l.b16 %v749
        %v768 = vunpack.c.l.b16 %v753
        %v769 = vunpack.c.l.b16 %v756
        %v770 = vpack.c.b16 %v763, %v762
        %v771 = vpack.c.b16 %v765, %v764
        %v772 = vpack.c.b16 %v767, %v766
        %v773 = vpack.c.b16 %v769, %v768
        %v778 = vunpack.c.l.b16 %v758
        %v779 = vunpack.c.l.b16 %v759
        %v780 = vunpack.c.l.b16 %v760
        %v781 = vunpack.c.l.b16 %v761
        %v782 = vpack.c.b16 %v779, %v778
        %v783 = vpack.c.b16 %v781, %v780
        %v787 = vsel %vm594, %v770, 0
        %v790 = vsel %vm594, %v771, 0
        %v793 = vsel %vm594, %v772, 0
        %v796 = vsel %vm594, %v773, 0
        %798 = vmatpush.bf16.msra.mxu0 0
        %799 = vmatpush.bf16.msra.mxu0 0
        %800 = vmatpush.bf16.msra.mxu0 0
        %801 = vmatpush.bf16.msra.mxu0 0
        %802 = vmatpush.bf16.msra.mxu0 0
        %803 = vmatpush.bf16.msra.mxu0 0
        %804 = vmatpush.bf16.msra.mxu0 %v783
        %805 = vmatpush.bf16.msra.mxu0 %v782
        %806 = vmatmul.bf16.gmra.mxu0 %v787
        %v807 = vpop.f32.mrf.mxu0
        %v808 = vadd.f32 0.0, %v807
        %v809 = vpop.f32.mrf.mxu0
        %v810 = vadd.f32 0.0, %v809
        %811 = vmatmul.bf16.gmra.mxu0 %v790
        %v812 = vpop.f32.mrf.mxu0
        %v813 = vadd.f32 0.0, %v812
        %v814 = vpop.f32.mrf.mxu0
        %v815 = vadd.f32 0.0, %v814
        %816 = vmatmul.bf16.gmra.mxu0 %v793
        %v817 = vpop.f32.mrf.mxu0
        %v818 = vadd.f32 0.0, %v817
        %v819 = vpop.f32.mrf.mxu0
        %v820 = vadd.f32 0.0, %v819
        %821 = vmatmul.bf16.gmra.mxu0 %v796
        %v822 = vpop.f32.mrf.mxu0
        %v823 = vadd.f32 0.0, %v822
        %v824 = vpop.f32.mrf.mxu0
        %v825 = vadd.f32 0.0, %v824
        %826 = vdwg.mxu0
        %v831 = vunpack.c.l.b16 %v710
        %v832 = vunpack.c.l.b16 %v711
        %v833 = vunpack.c.l.b16 %v712
        %v834 = vunpack.c.l.b16 %v713
        %v835 = vpack.c.b16 %v832, %v831
        %v836 = vpack.c.b16 %v834, %v833
        %839 = vmatpush.bf16.msra.mxu0 0
        %840 = vmatpush.bf16.msra.mxu0 0
        %841 = vmatpush.bf16.msra.mxu0 0
        %842 = vmatpush.bf16.msra.mxu0 0
        %843 = vmatpush.bf16.msra.mxu0 0
        %844 = vmatpush.bf16.msra.mxu0 0
        %845 = vmatpush.bf16.msra.mxu0 %v836
        %846 = vmatpush.bf16.msra.mxu0 %v835
        %847 = vmatmul.bf16.gmra.mxu0 %v596
        %v848 = vpop.f32.mrf.mxu0
        %v849 = vadd.f32 %v808, %v848
        %v850 = vpop.f32.mrf.mxu0
        %v851 = vadd.f32 %v810, %v850
        %852 = vmatmul.bf16.gmra.mxu0 %v599
        %v853 = vpop.f32.mrf.mxu0
        %v854 = vadd.f32 %v813, %v853
        %v855 = vpop.f32.mrf.mxu0
        %v856 = vadd.f32 %v815, %v855
        %857 = vmatmul.bf16.gmra.mxu0 %v602
        %v858 = vpop.f32.mrf.mxu0
        %v859 = vadd.f32 %v818, %v858
        %v860 = vpop.f32.mrf.mxu0
        %v861 = vadd.f32 %v820, %v860
        %862 = vmatmul.bf16.gmra.mxu0 %v605
        %v863 = vpop.f32.mrf.mxu0
        %v864 = vadd.f32 %v823, %v863
        %v865 = vpop.f32.mrf.mxu0
        %v866 = vadd.f32 %v825, %v865
        %867 = vdwg.mxu0
        %v868 = vld [vmem:[%s333] sm:$0xf]
        %v869 = vld [vmem:[%s333 + $0x4] sm:$0xf]
        %v870 = vld [vmem:[%s333 + $0xc] sm:$0xf]
        %v871 = vld [vmem:[%s333 + $0x10] sm:$0xf]
        %v872 = vld [vmem:[%s333 + $0x18] sm:$0xf]
        %v873 = vld [vmem:[%s333 + $0x1c] sm:$0xf]
        %v874 = vld [vmem:[%s333 + $0x24] sm:$0xf]
        %v875 = vld [vmem:[%s333 + $0x28] sm:$0xf]
        %s876 = scalar_lea.vmem %s155, 112
        %v877 = vld [vmem:[%s876] sm:$0xf]
        %v878 = vld [vmem:[%s876 + $0x4] sm:$0xf]
        %v879 = vld [vmem:[%s876 + $0x8] sm:$0xf]
        %v880 = vld [vmem:[%s876 + $0xc] sm:$0xf]
        %v889 = vunpack.c.l.b16 %v868
        %v890 = vunpack.c.l.b16 %v869
        %v891 = vunpack.c.l.b16 %v870
        %v892 = vunpack.c.l.b16 %v871
        %v893 = vunpack.c.l.b16 %v872
        %v894 = vunpack.c.l.b16 %v873
        %v895 = vunpack.c.l.b16 %v874
        %v896 = vunpack.c.l.b16 %v875
        %v897 = vpack.c.b16 %v890, %v889
        %v898 = vpack.c.b16 %v892, %v891
        %v899 = vpack.c.b16 %v894, %v893
        %v900 = vpack.c.b16 %v896, %v895
        %v905 = vunpack.c.l.b16 %v877
        %v906 = vunpack.c.l.b16 %v878
        %v907 = vunpack.c.l.b16 %v879
        %v908 = vunpack.c.l.b16 %v880
        %v909 = vpack.c.b16 %v906, %v905
        %v910 = vpack.c.b16 %v908, %v907
        %v914 = vsel %vm594, %v897, 0
        %v917 = vsel %vm594, %v898, 0
        %v920 = vsel %vm594, %v899, 0
        %v923 = vsel %vm594, %v900, 0
        %925 = vmatpush.bf16.msra.mxu0 0
        %926 = vmatpush.bf16.msra.mxu0 0
        %927 = vmatpush.bf16.msra.mxu0 0
        %928 = vmatpush.bf16.msra.mxu0 0
        %929 = vmatpush.bf16.msra.mxu0 0
        %930 = vmatpush.bf16.msra.mxu0 0
        %931 = vmatpush.bf16.msra.mxu0 %v910
        %932 = vmatpush.bf16.msra.mxu0 %v909
        %933 = vmatmul.bf16.gmra.mxu0 %v914
        %v934 = vpop.f32.mrf.mxu0
        %v935 = vadd.f32 0.0, %v934
        %v936 = vpop.f32.mrf.mxu0
        %v937 = vadd.f32 0.0, %v936
        %938 = vmatmul.bf16.gmra.mxu0 %v917
        %v939 = vpop.f32.mrf.mxu0
        %v940 = vadd.f32 0.0, %v939
        %v941 = vpop.f32.mrf.mxu0
        %v942 = vadd.f32 0.0, %v941
        %943 = vmatmul.bf16.gmra.mxu0 %v920
        %v944 = vpop.f32.mrf.mxu0
        %v945 = vadd.f32 0.0, %v944
        %v946 = vpop.f32.mrf.mxu0
        %v947 = vadd.f32 0.0, %v946
        %948 = vmatmul.bf16.gmra.mxu0 %v923
        %v949 = vpop.f32.mrf.mxu0
        %v950 = vadd.f32 0.0, %v949
        %v951 = vpop.f32.mrf.mxu0
        %v952 = vadd.f32 0.0, %v951
        %953 = vdwg.mxu0
        %v954 = vadd.f32 %v690, %v935
        %v955 = vadd.f32 %v692, %v937
        %v956 = vadd.f32 %v695, %v940
        %v957 = vadd.f32 %v697, %v942
        %v958 = vadd.f32 %v700, %v945
        %v959 = vadd.f32 %v702, %v947
        %v960 = vadd.f32 %v705, %v950
        %v961 = vadd.f32 %v707, %v952
        %s962 = scalar_lea.vmem %s155, 176
        %v963 = vld [vmem:[%s962] sm:$0xf]
        %v964 = vld [vmem:[%s962 + $0x4] sm:$0xf]
        %v965 = vld [vmem:[%s962 + $0x8] sm:$0xf]
        %v966 = vld [vmem:[%s962 + $0xc] sm:$0xf]
        %v967 = vld [vmem:[%s333] sm:$0xf]
        %v968 = vld [vmem:[%s333 + $0x4] sm:$0xf]
        %v969 = vld [vmem:[%s333 + $0x8] sm:$0x1]
        %v970 = vld [vmem:[%s333 + $0xc] sm:$0xf]
        %v971 = vld [vmem:[%s333 + $0x10] sm:$0xf]
        %v972 = vld [vmem:[%s333 + $0x14] sm:$0x1]
        %v973 = vld [vmem:[%s333 + $0x18] sm:$0xf]
        %v974 = vld [vmem:[%s333 + $0x1c] sm:$0xf]
        %v975 = vld [vmem:[%s333 + $0x20] sm:$0x1]
        %v976 = vld [vmem:[%s333 + $0x24] sm:$0xf]
        %v977 = vld [vmem:[%s333 + $0x28] sm:$0xf]
        %v978 = vld [vmem:[%s333 + $0x2c] sm:$0x1]
        %v980 = vshrl.u32 %v967, 16
        %v982 = vrot.slane %v980, 4
        %v983 = vshll.u32 %v967, 16
        %v985 = vrot.slane %v983, 5
        %v986 = vor.u32 %v982, %v985
        %v987 = vrot.slane %v986, 4
        %v989 = vshll.u32 %v968, 16
        %v991 = vrot.slane %v989, 5
        %v992 = vsel %vm468, %v987, %v991
        %v993 = vshrl.u32 %v968, 16
        %v995 = vrot.slane %v993, 4
        %v996 = vor.u32 %v995, %v991
        %v997 = vrot.slane %v996, 4
        %v999 = vshll.u32 %v969, 16
        %v1001 = vrot.slane %v999, 5
        %v1002 = vsel %vm468, %v997, %v1001
        %v1004 = vshrl.u32 %v970, 16
        %v1006 = vrot.slane %v1004, 4
        %v1007 = vshll.u32 %v970, 16
        %v1009 = vrot.slane %v1007, 5
        %v1010 = vor.u32 %v1006, %v1009
        %v1011 = vrot.slane %v1010, 4
        %v1013 = vshll.u32 %v971, 16
        %v1015 = vrot.slane %v1013, 5
        %v1016 = vsel %vm468, %v1011, %v1015
        %v1017 = vshrl.u32 %v971, 16
        %v1019 = vrot.slane %v1017, 4
        %v1020 = vor.u32 %v1019, %v1015
        %v1021 = vrot.slane %v1020, 4
        %v1023 = vshll.u32 %v972, 16
        %v1025 = vrot.slane %v1023, 5
        %v1026 = vsel %vm468, %v1021, %v1025
        %v1028 = vshrl.u32 %v973, 16
        %v1030 = vrot.slane %v1028, 4
        %v1031 = vshll.u32 %v973, 16
        %v1033 = vrot.slane %v1031, 5
        %v1034 = vor.u32 %v1030, %v1033
        %v1035 = vrot.slane %v1034, 4
        %v1037 = vshll.u32 %v974, 16
        %v1039 = vrot.slane %v1037, 5
        %v1040 = vsel %vm468, %v1035, %v1039
        %v1041 = vshrl.u32 %v974, 16
        %v1043 = vrot.slane %v1041, 4
        %v1044 = vor.u32 %v1043, %v1039
        %v1045 = vrot.slane %v1044, 4
        %v1047 = vshll.u32 %v975, 16
        %v1049 = vrot.slane %v1047, 5
        %v1050 = vsel %vm468, %v1045, %v1049
        %v1052 = vshrl.u32 %v976, 16
        %v1054 = vrot.slane %v1052, 4
        %v1055 = vshll.u32 %v976, 16
        %v1057 = vrot.slane %v1055, 5
        %v1058 = vor.u32 %v1054, %v1057
        %v1059 = vrot.slane %v1058, 4
        %v1061 = vshll.u32 %v977, 16
        %v1063 = vrot.slane %v1061, 5
        %v1064 = vsel %vm468, %v1059, %v1063
        %v1065 = vshrl.u32 %v977, 16
        %v1067 = vrot.slane %v1065, 4
        %v1068 = vor.u32 %v1067, %v1063
        %v1069 = vrot.slane %v1068, 4
        %v1071 = vshll.u32 %v978, 16
        %v1073 = vrot.slane %v1071, 5
        %v1074 = vsel %vm468, %v1069, %v1073
        %s1075 = scalar_lea.vmem %s155, 80
        %v1076 = vld [vmem:[%s1075] sm:$0xf]
        %v1077 = vld [vmem:[%s1075 + $0x4] sm:$0xf]
        %v1078 = vld [vmem:[%s1075 + $0x8] sm:$0xf]
        %v1079 = vld [vmem:[%s1075 + $0xc] sm:$0xf]
        %v1080 = vunpack.c.l.b16 %v992
        %v1081 = vunpack.c.l.b16 %v1002
        %v1082 = vunpack.c.l.b16 %v1016
        %v1083 = vunpack.c.l.b16 %v1026
        %v1084 = vunpack.c.l.b16 %v1040
        %v1085 = vunpack.c.l.b16 %v1050
        %v1086 = vunpack.c.l.b16 %v1064
        %v1087 = vunpack.c.l.b16 %v1074
        %v1088 = vpack.c.b16 %v1081, %v1080
        %v1089 = vpack.c.b16 %v1083, %v1082
        %v1090 = vpack.c.b16 %v1085, %v1084
        %v1091 = vpack.c.b16 %v1087, %v1086
        %v1096 = vunpack.c.l.b16 %v1076
        %v1097 = vunpack.c.l.b16 %v1077
        %v1098 = vunpack.c.l.b16 %v1078
        %v1099 = vunpack.c.l.b16 %v1079
        %v1100 = vpack.c.b16 %v1097, %v1096
        %v1101 = vpack.c.b16 %v1099, %v1098
        %v1105 = vsel %vm594, %v1088, 0
        %v1108 = vsel %vm594, %v1089, 0
        %v1111 = vsel %vm594, %v1090, 0
        %v1114 = vsel %vm594, %v1091, 0
        %1116 = vmatpush.bf16.msra.mxu0 0
        %1117 = vmatpush.bf16.msra.mxu0 0
        %1118 = vmatpush.bf16.msra.mxu0 0
        %1119 = vmatpush.bf16.msra.mxu0 0
        %1120 = vmatpush.bf16.msra.mxu0 0
        %1121 = vmatpush.bf16.msra.mxu0 0
        %1122 = vmatpush.bf16.msra.mxu0 %v1101
        %1123 = vmatpush.bf16.msra.mxu0 %v1100
        %1124 = vmatmul.bf16.gmra.mxu0 %v1105
        %v1125 = vpop.f32.mrf.mxu0
        %v1126 = vadd.f32 0.0, %v1125
        %v1127 = vpop.f32.mrf.mxu0
        %v1128 = vadd.f32 0.0, %v1127
        %1129 = vmatmul.bf16.gmra.mxu0 %v1108
        %v1130 = vpop.f32.mrf.mxu0
        %v1131 = vadd.f32 0.0, %v1130
        %v1132 = vpop.f32.mrf.mxu0
        %v1133 = vadd.f32 0.0, %v1132
        %1134 = vmatmul.bf16.gmra.mxu0 %v1111
        %v1135 = vpop.f32.mrf.mxu0
        %v1136 = vadd.f32 0.0, %v1135
        %v1137 = vpop.f32.mrf.mxu0
        %v1138 = vadd.f32 0.0, %v1137
        %1139 = vmatmul.bf16.gmra.mxu0 %v1114
        %v1140 = vpop.f32.mrf.mxu0
        %v1141 = vadd.f32 0.0, %v1140
        %v1142 = vpop.f32.mrf.mxu0
        %v1143 = vadd.f32 0.0, %v1142
        %1144 = vdwg.mxu0
        %v1145 = vadd.f32 %v954, %v1126
        %v1146 = vadd.f32 %v955, %v1128
        %v1147 = vadd.f32 %v956, %v1131
        %v1148 = vadd.f32 %v957, %v1133
        %v1149 = vadd.f32 %v958, %v1136
        %v1150 = vadd.f32 %v959, %v1138
        %v1151 = vadd.f32 %v960, %v1141
        %v1152 = vadd.f32 %v961, %v1143
        %s1153 = scalar_lea.vmem %s155, 96
        %v1154 = vld [vmem:[%s1153] sm:$0xf]
        %v1155 = vld [vmem:[%s1153 + $0x4] sm:$0xf]
        %v1156 = vld [vmem:[%s1153 + $0x8] sm:$0xf]
        %v1157 = vld [vmem:[%s1153 + $0xc] sm:$0xf]
        %v1162 = vunpack.c.l.b16 %v1154
        %v1163 = vunpack.c.l.b16 %v1155
        %v1164 = vunpack.c.l.b16 %v1156
        %v1165 = vunpack.c.l.b16 %v1157
        %v1166 = vpack.c.b16 %v1163, %v1162
        %v1167 = vpack.c.b16 %v1165, %v1164
        %1170 = vmatpush.bf16.msra.mxu0 0
        %1171 = vmatpush.bf16.msra.mxu0 0
        %1172 = vmatpush.bf16.msra.mxu0 0
        %1173 = vmatpush.bf16.msra.mxu0 0
        %1174 = vmatpush.bf16.msra.mxu0 0
        %1175 = vmatpush.bf16.msra.mxu0 0
        %1176 = vmatpush.bf16.msra.mxu0 %v1167
        %1177 = vmatpush.bf16.msra.mxu0 %v1166
        %1178 = vmatmul.bf16.gmra.mxu0 %v1105
        %v1179 = vpop.f32.mrf.mxu0
        %v1180 = vadd.f32 0.0, %v1179
        %v1181 = vpop.f32.mrf.mxu0
        %v1182 = vadd.f32 0.0, %v1181
        %1183 = vmatmul.bf16.gmra.mxu0 %v1108
        %v1184 = vpop.f32.mrf.mxu0
        %v1185 = vadd.f32 0.0, %v1184
        %v1186 = vpop.f32.mrf.mxu0
        %v1187 = vadd.f32 0.0, %v1186
        %1188 = vmatmul.bf16.gmra.mxu0 %v1111
        %v1189 = vpop.f32.mrf.mxu0
        %v1190 = vadd.f32 0.0, %v1189
        %v1191 = vpop.f32.mrf.mxu0
        %v1192 = vadd.f32 0.0, %v1191
        %1193 = vmatmul.bf16.gmra.mxu0 %v1114
        %v1194 = vpop.f32.mrf.mxu0
        %v1195 = vadd.f32 0.0, %v1194
        %v1196 = vpop.f32.mrf.mxu0
        %v1197 = vadd.f32 0.0, %v1196
        %1198 = vdwg.mxu0
        %v1199 = vadd.f32 %v849, %v1180
        %v1200 = vadd.f32 %v851, %v1182
        %v1201 = vadd.f32 %v854, %v1185
        %v1202 = vadd.f32 %v856, %v1187
        %v1203 = vadd.f32 %v859, %v1190
        %v1204 = vadd.f32 %v861, %v1192
        %v1205 = vadd.f32 %v864, %v1195
        %v1206 = vadd.f32 %v866, %v1197
        %s1207 = scalar_lea.vmem %s155, 144
        %v1208 = vld [vmem:[%s1207] sm:$0xf]
        %v1209 = vld [vmem:[%s1207 + $0x4] sm:$0xf]
        %v1210 = vld [vmem:[%s1207 + $0x8] sm:$0xf]
        %v1211 = vld [vmem:[%s1207 + $0xc] sm:$0xf]
        %v1216 = vunpack.c.l.b16 %v1208
        %v1217 = vunpack.c.l.b16 %v1209
        %v1218 = vunpack.c.l.b16 %v1210
        %v1219 = vunpack.c.l.b16 %v1211
        %v1220 = vpack.c.b16 %v1217, %v1216
        %v1221 = vpack.c.b16 %v1219, %v1218
        %1224 = vmatpush.bf16.msra.mxu0 0
        %1225 = vmatpush.bf16.msra.mxu0 0
        %1226 = vmatpush.bf16.msra.mxu0 0
        %1227 = vmatpush.bf16.msra.mxu0 0
        %1228 = vmatpush.bf16.msra.mxu0 0
        %1229 = vmatpush.bf16.msra.mxu0 0
        %1230 = vmatpush.bf16.msra.mxu0 %v1221
        %1231 = vmatpush.bf16.msra.mxu0 %v1220
        %1232 = vmatmul.bf16.gmra.mxu0 %v1105
        %v1233 = vpop.f32.mrf.mxu0
        %v1234 = vadd.f32 0.0, %v1233
        %v1235 = vpop.f32.mrf.mxu0
        %v1236 = vadd.f32 0.0, %v1235
        %1237 = vmatmul.bf16.gmra.mxu0 %v1108
        %v1238 = vpop.f32.mrf.mxu0
        %v1239 = vadd.f32 0.0, %v1238
        %v1240 = vpop.f32.mrf.mxu0
        %v1241 = vadd.f32 0.0, %v1240
        %1242 = vmatmul.bf16.gmra.mxu0 %v1111
        %v1243 = vpop.f32.mrf.mxu0
        %v1244 = vadd.f32 0.0, %v1243
        %v1245 = vpop.f32.mrf.mxu0
        %v1246 = vadd.f32 0.0, %v1245
        %1247 = vmatmul.bf16.gmra.mxu0 %v1114
        %v1248 = vpop.f32.mrf.mxu0
        %v1249 = vadd.f32 0.0, %v1248
        %v1250 = vpop.f32.mrf.mxu0
        %v1251 = vadd.f32 0.0, %v1250
        %1252 = vdwg.mxu0
        %v1257 = vunpack.c.l.b16 %v963
        %v1258 = vunpack.c.l.b16 %v964
        %v1259 = vunpack.c.l.b16 %v965
        %v1260 = vunpack.c.l.b16 %v966
        %v1261 = vpack.c.b16 %v1258, %v1257
        %v1262 = vpack.c.b16 %v1260, %v1259
        %1265 = vmatpush.bf16.msra.mxu0 0
        %1266 = vmatpush.bf16.msra.mxu0 0
        %1267 = vmatpush.bf16.msra.mxu0 0
        %1268 = vmatpush.bf16.msra.mxu0 0
        %1269 = vmatpush.bf16.msra.mxu0 0
        %1270 = vmatpush.bf16.msra.mxu0 0
        %1271 = vmatpush.bf16.msra.mxu0 %v1262
        %1272 = vmatpush.bf16.msra.mxu0 %v1261
        %1273 = vmatmul.bf16.gmra.mxu0 %v914
        %v1274 = vpop.f32.mrf.mxu0
        %v1275 = vadd.f32 %v1234, %v1274
        %v1276 = vpop.f32.mrf.mxu0
        %v1277 = vadd.f32 %v1236, %v1276
        %1278 = vmatmul.bf16.gmra.mxu0 %v917
        %v1279 = vpop.f32.mrf.mxu0
        %v1280 = vadd.f32 %v1239, %v1279
        %v1281 = vpop.f32.mrf.mxu0
        %v1282 = vadd.f32 %v1241, %v1281
        %1283 = vmatmul.bf16.gmra.mxu0 %v920
        %v1284 = vpop.f32.mrf.mxu0
        %v1285 = vadd.f32 %v1244, %v1284
        %v1286 = vpop.f32.mrf.mxu0
        %v1287 = vadd.f32 %v1246, %v1286
        %1288 = vmatmul.bf16.gmra.mxu0 %v923
        %v1289 = vpop.f32.mrf.mxu0
        %v1290 = vadd.f32 %v1249, %v1289
        %v1291 = vpop.f32.mrf.mxu0
        %v1292 = vadd.f32 %v1251, %v1291
        %1293 = vdwg.mxu0
        %s1294 = scalar_lea.vmem %s155, 160
        %v1295 = vld [vmem:[%s1294] sm:$0xf]
        %v1296 = vld [vmem:[%s1294 + $0x4] sm:$0xf]
        %v1297 = vld [vmem:[%s1294 + $0x8] sm:$0xf]
        %v1298 = vld [vmem:[%s1294 + $0xc] sm:$0xf]
        %v1299 = vld [vmem:[%s333] sm:$0xe]
        %v1300 = vld [vmem:[%s333 + $0xc] sm:$0xe]
        %v1301 = vld [vmem:[%s333 + $0x18] sm:$0xe]
        %v1302 = vld [vmem:[%s333 + $0x24] sm:$0xe]
        %v1315 = vrot.slane %v1299, 5
        %v1316 = vrot.slane %v1315, 4
        %v1317 = vrot.slane %v968, 5
        %v1318 = vsel %vm728, %v1316, %v1317
        %v1319 = vrot.slane %v1317, 4
        %v1320 = vrot.slane %v969, 5
        %v1321 = vsel %vm728, %v1319, %v1320
        %v1322 = vrot.slane %v1300, 5
        %v1323 = vrot.slane %v1322, 4
        %v1324 = vrot.slane %v971, 5
        %v1325 = vsel %vm728, %v1323, %v1324
        %v1326 = vrot.slane %v1324, 4
        %v1327 = vrot.slane %v972, 5
        %v1328 = vsel %vm728, %v1326, %v1327
        %v1329 = vrot.slane %v1301, 5
        %v1330 = vrot.slane %v1329, 4
        %v1331 = vrot.slane %v974, 5
        %v1332 = vsel %vm728, %v1330, %v1331
        %v1333 = vrot.slane %v1331, 4
        %v1334 = vrot.slane %v975, 5
        %v1335 = vsel %vm728, %v1333, %v1334
        %v1336 = vrot.slane %v1302, 5
        %v1337 = vrot.slane %v1336, 4
        %v1338 = vrot.slane %v977, 5
        %v1339 = vsel %vm728, %v1337, %v1338
        %v1340 = vrot.slane %v1338, 4
        %v1341 = vrot.slane %v978, 5
        %v1342 = vsel %vm728, %v1340, %v1341
        %s1343 = scalar_lea.vmem %s155, 64
        %v1344 = vld [vmem:[%s1343] sm:$0xf]
        %v1345 = vld [vmem:[%s1343 + $0x4] sm:$0xf]
        %v1346 = vld [vmem:[%s1343 + $0x8] sm:$0xf]
        %v1347 = vld [vmem:[%s1343 + $0xc] sm:$0xf]
        %v1348 = vunpack.c.l.b16 %v1318
        %v1349 = vunpack.c.l.b16 %v1321
        %v1350 = vunpack.c.l.b16 %v1325
        %v1351 = vunpack.c.l.b16 %v1328
        %v1352 = vunpack.c.l.b16 %v1332
        %v1353 = vunpack.c.l.b16 %v1335
        %v1354 = vunpack.c.l.b16 %v1339
        %v1355 = vunpack.c.l.b16 %v1342
        %v1356 = vpack.c.b16 %v1349, %v1348
        %v1357 = vpack.c.b16 %v1351, %v1350
        %v1358 = vpack.c.b16 %v1353, %v1352
        %v1359 = vpack.c.b16 %v1355, %v1354
        %v1364 = vunpack.c.l.b16 %v1344
        %v1365 = vunpack.c.l.b16 %v1345
        %v1366 = vunpack.c.l.b16 %v1346
        %v1367 = vunpack.c.l.b16 %v1347
        %v1368 = vpack.c.b16 %v1365, %v1364
        %v1369 = vpack.c.b16 %v1367, %v1366
        %v1373 = vsel %vm594, %v1356, 0
        %v1376 = vsel %vm594, %v1357, 0
        %v1379 = vsel %vm594, %v1358, 0
        %v1382 = vsel %vm594, %v1359, 0
        %1384 = vmatpush.bf16.msra.mxu0 0
        %1385 = vmatpush.bf16.msra.mxu0 0
        %1386 = vmatpush.bf16.msra.mxu0 0
        %1387 = vmatpush.bf16.msra.mxu0 0
        %1388 = vmatpush.bf16.msra.mxu0 0
        %1389 = vmatpush.bf16.msra.mxu0 0
        %1390 = vmatpush.bf16.msra.mxu0 %v1369
        %1391 = vmatpush.bf16.msra.mxu0 %v1368
        %1392 = vmatmul.bf16.gmra.mxu0 %v1373
        %v1393 = vpop.f32.mrf.mxu0
        %v1394 = vadd.f32 0.0, %v1393
        %v1395 = vpop.f32.mrf.mxu0
        %v1396 = vadd.f32 0.0, %v1395
        %1397 = vmatmul.bf16.gmra.mxu0 %v1376
        %v1398 = vpop.f32.mrf.mxu0
        %v1399 = vadd.f32 0.0, %v1398
        %v1400 = vpop.f32.mrf.mxu0
        %v1401 = vadd.f32 0.0, %v1400
        %1402 = vmatmul.bf16.gmra.mxu0 %v1379
        %v1403 = vpop.f32.mrf.mxu0
        %v1404 = vadd.f32 0.0, %v1403
        %v1405 = vpop.f32.mrf.mxu0
        %v1406 = vadd.f32 0.0, %v1405
        %1407 = vmatmul.bf16.gmra.mxu0 %v1382
        %v1408 = vpop.f32.mrf.mxu0
        %v1409 = vadd.f32 0.0, %v1408
        %v1410 = vpop.f32.mrf.mxu0
        %v1411 = vadd.f32 0.0, %v1410
        %1412 = vdwg.mxu0
        %v1413 = vadd.f32 %v1199, %v1394
        %v1414 = vadd.f32 %v1200, %v1396
        %v1415 = vadd.f32 %v1201, %v1399
        %v1416 = vadd.f32 %v1202, %v1401
        %v1417 = vadd.f32 %v1203, %v1404
        %v1418 = vadd.f32 %v1204, %v1406
        %v1419 = vadd.f32 %v1205, %v1409
        %v1420 = vadd.f32 %v1206, %v1411
        %s1421 = scalar_lea.vmem %s155, 128
        %v1422 = vld [vmem:[%s1421] sm:$0xf]
        %v1423 = vld [vmem:[%s1421 + $0x4] sm:$0xf]
        %v1424 = vld [vmem:[%s1421 + $0x8] sm:$0xf]
        %v1425 = vld [vmem:[%s1421 + $0xc] sm:$0xf]
        %v1430 = vunpack.c.l.b16 %v1422
        %v1431 = vunpack.c.l.b16 %v1423
        %v1432 = vunpack.c.l.b16 %v1424
        %v1433 = vunpack.c.l.b16 %v1425
        %v1434 = vpack.c.b16 %v1431, %v1430
        %v1435 = vpack.c.b16 %v1433, %v1432
        %1438 = vmatpush.bf16.msra.mxu0 0
        %1439 = vmatpush.bf16.msra.mxu0 0
        %1440 = vmatpush.bf16.msra.mxu0 0
        %1441 = vmatpush.bf16.msra.mxu0 0
        %1442 = vmatpush.bf16.msra.mxu0 0
        %1443 = vmatpush.bf16.msra.mxu0 0
        %1444 = vmatpush.bf16.msra.mxu0 %v1435
        %1445 = vmatpush.bf16.msra.mxu0 %v1434
        %1446 = vmatmul.bf16.gmra.mxu0 %v1373
        %v1447 = vpop.f32.mrf.mxu0
        %v1448 = vadd.f32 0.0, %v1447
        %v1449 = vpop.f32.mrf.mxu0
        %v1450 = vadd.f32 0.0, %v1449
        %1451 = vmatmul.bf16.gmra.mxu0 %v1376
        %v1452 = vpop.f32.mrf.mxu0
        %v1453 = vadd.f32 0.0, %v1452
        %v1454 = vpop.f32.mrf.mxu0
        %v1455 = vadd.f32 0.0, %v1454
        %1456 = vmatmul.bf16.gmra.mxu0 %v1379
        %v1457 = vpop.f32.mrf.mxu0
        %v1458 = vadd.f32 0.0, %v1457
        %v1459 = vpop.f32.mrf.mxu0
        %v1460 = vadd.f32 0.0, %v1459
        %1461 = vmatmul.bf16.gmra.mxu0 %v1382
        %v1462 = vpop.f32.mrf.mxu0
        %v1463 = vadd.f32 0.0, %v1462
        %v1464 = vpop.f32.mrf.mxu0
        %v1465 = vadd.f32 0.0, %v1464
        %1466 = vdwg.mxu0
        %v1471 = vunpack.c.l.b16 %v1295
        %v1472 = vunpack.c.l.b16 %v1296
        %v1473 = vunpack.c.l.b16 %v1297
        %v1474 = vunpack.c.l.b16 %v1298
        %v1475 = vpack.c.b16 %v1472, %v1471
        %v1476 = vpack.c.b16 %v1474, %v1473
        %1479 = vmatpush.bf16.msra.mxu0 0
        %1480 = vmatpush.bf16.msra.mxu0 0
        %1481 = vmatpush.bf16.msra.mxu0 0
        %1482 = vmatpush.bf16.msra.mxu0 0
        %1483 = vmatpush.bf16.msra.mxu0 0
        %1484 = vmatpush.bf16.msra.mxu0 0
        %1485 = vmatpush.bf16.msra.mxu0 %v1476
        %1486 = vmatpush.bf16.msra.mxu0 %v1475
        %1487 = vmatmul.bf16.gmra.mxu0 %v1105
        %v1488 = vpop.f32.mrf.mxu0
        %v1489 = vadd.f32 %v1448, %v1488
        %v1490 = vpop.f32.mrf.mxu0
        %v1491 = vadd.f32 %v1450, %v1490
        %1492 = vmatmul.bf16.gmra.mxu0 %v1108
        %v1493 = vpop.f32.mrf.mxu0
        %v1494 = vadd.f32 %v1453, %v1493
        %v1495 = vpop.f32.mrf.mxu0
        %v1496 = vadd.f32 %v1455, %v1495
        %1497 = vmatmul.bf16.gmra.mxu0 %v1111
        %v1498 = vpop.f32.mrf.mxu0
        %v1499 = vadd.f32 %v1458, %v1498
        %v1500 = vpop.f32.mrf.mxu0
        %v1501 = vadd.f32 %v1460, %v1500
        %1502 = vmatmul.bf16.gmra.mxu0 %v1114
        %v1503 = vpop.f32.mrf.mxu0
        %v1504 = vadd.f32 %v1463, %v1503
        %v1505 = vpop.f32.mrf.mxu0
        %v1506 = vadd.f32 %v1465, %v1505
        %1507 = vdwg.mxu0
        %s1508 = sadd.s32 %s158, 2
        %s1509 = smul.u32 %s1508, 3
        %s1510 = smul.addr %s1509, 4
        %s1511 = scalar_lea.vmem [#allocation2], %s1510
        %v1512 = vld [vmem:[%s1511] sm:$0xf]
        %v1513 = vld [vmem:[%s1511 + $0x4] sm:$0xf]
        %v1514 = vld [vmem:[%s1511 + $0xc] sm:$0xf]
        %v1515 = vld [vmem:[%s1511 + $0x10] sm:$0xf]
        %v1516 = vld [vmem:[%s1511 + $0x18] sm:$0xf]
        %v1517 = vld [vmem:[%s1511 + $0x1c] sm:$0xf]
        %v1518 = vld [vmem:[%s1511 + $0x24] sm:$0xf]
        %v1519 = vld [vmem:[%s1511 + $0x28] sm:$0xf]
        %s1520 = scalar_lea.vmem %s155, 48
        %v1521 = vld [vmem:[%s1520] sm:$0xf]
        %v1522 = vld [vmem:[%s1520 + $0x4] sm:$0xf]
        %v1523 = vld [vmem:[%s1520 + $0x8] sm:$0xf]
        %v1524 = vld [vmem:[%s1520 + $0xc] sm:$0xf]
        %v1533 = vunpack.c.l.b16 %v1512
        %v1534 = vunpack.c.l.b16 %v1513
        %v1535 = vunpack.c.l.b16 %v1514
        %v1536 = vunpack.c.l.b16 %v1515
        %v1537 = vunpack.c.l.b16 %v1516
        %v1538 = vunpack.c.l.b16 %v1517
        %v1539 = vunpack.c.l.b16 %v1518
        %v1540 = vunpack.c.l.b16 %v1519
        %v1541 = vpack.c.b16 %v1534, %v1533
        %v1542 = vpack.c.b16 %v1536, %v1535
        %v1543 = vpack.c.b16 %v1538, %v1537
        %v1544 = vpack.c.b16 %v1540, %v1539
        %v1549 = vunpack.c.l.b16 %v1521
        %v1550 = vunpack.c.l.b16 %v1522
        %v1551 = vunpack.c.l.b16 %v1523
        %v1552 = vunpack.c.l.b16 %v1524
        %v1553 = vpack.c.b16 %v1550, %v1549
        %v1554 = vpack.c.b16 %v1552, %v1551
        %v1558 = vsel %vm594, %v1541, 0
        %v1561 = vsel %vm594, %v1542, 0
        %v1564 = vsel %vm594, %v1543, 0
        %v1567 = vsel %vm594, %v1544, 0
        %1569 = vmatpush.bf16.msra.mxu0 0
        %1570 = vmatpush.bf16.msra.mxu0 0
        %1571 = vmatpush.bf16.msra.mxu0 0
        %1572 = vmatpush.bf16.msra.mxu0 0
        %1573 = vmatpush.bf16.msra.mxu0 0
        %1574 = vmatpush.bf16.msra.mxu0 0
        %1575 = vmatpush.bf16.msra.mxu0 %v1554
        %1576 = vmatpush.bf16.msra.mxu0 %v1553
        %1577 = vmatmul.bf16.gmra.mxu0 %v1558
        %v1578 = vpop.f32.mrf.mxu0
        %v1579 = vadd.f32 0.0, %v1578
        %v1580 = vpop.f32.mrf.mxu0
        %v1581 = vadd.f32 0.0, %v1580
        %1582 = vmatmul.bf16.gmra.mxu0 %v1561
        %v1583 = vpop.f32.mrf.mxu0
        %v1584 = vadd.f32 0.0, %v1583
        %v1585 = vpop.f32.mrf.mxu0
        %v1586 = vadd.f32 0.0, %v1585
        %1587 = vmatmul.bf16.gmra.mxu0 %v1564
        %v1588 = vpop.f32.mrf.mxu0
        %v1589 = vadd.f32 0.0, %v1588
        %v1590 = vpop.f32.mrf.mxu0
        %v1591 = vadd.f32 0.0, %v1590
        %1592 = vmatmul.bf16.gmra.mxu0 %v1567
        %v1593 = vpop.f32.mrf.mxu0
        %v1594 = vadd.f32 0.0, %v1593
        %v1595 = vpop.f32.mrf.mxu0
        %v1596 = vadd.f32 0.0, %v1595
        %1597 = vdwg.mxu0
        %v1598 = vadd.f32 %v1275, %v1579
        %v1599 = vadd.f32 %v1277, %v1581
        %v1600 = vadd.f32 %v1280, %v1584
        %v1601 = vadd.f32 %v1282, %v1586
        %v1602 = vadd.f32 %v1285, %v1589
        %v1603 = vadd.f32 %v1287, %v1591
        %v1604 = vadd.f32 %v1290, %v1594
        %v1605 = vadd.f32 %v1292, %v1596
        %v1606 = vld [vmem:[%s1511] sm:$0xf]
        %v1607 = vld [vmem:[%s1511 + $0x4] sm:$0xf]
        %v1608 = vld [vmem:[%s1511 + $0x8] sm:$0x1]
        %v1609 = vld [vmem:[%s1511 + $0xc] sm:$0xf]
        %v1610 = vld [vmem:[%s1511 + $0x10] sm:$0xf]
        %v1611 = vld [vmem:[%s1511 + $0x14] sm:$0x1]
        %v1612 = vld [vmem:[%s1511 + $0x18] sm:$0xf]
        %v1613 = vld [vmem:[%s1511 + $0x1c] sm:$0xf]
        %v1614 = vld [vmem:[%s1511 + $0x20] sm:$0x1]
        %v1615 = vld [vmem:[%s1511 + $0x24] sm:$0xf]
        %v1616 = vld [vmem:[%s1511 + $0x28] sm:$0xf]
        %v1617 = vld [vmem:[%s1511 + $0x2c] sm:$0x1]
        %v1619 = vshrl.u32 %v1606, 16
        %v1621 = vrot.slane %v1619, 4
        %v1622 = vshll.u32 %v1606, 16
        %v1624 = vrot.slane %v1622, 5
        %v1625 = vor.u32 %v1621, %v1624
        %v1626 = vrot.slane %v1625, 4
        %v1628 = vshll.u32 %v1607, 16
        %v1630 = vrot.slane %v1628, 5
        %v1631 = vsel %vm468, %v1626, %v1630
        %v1632 = vshrl.u32 %v1607, 16
        %v1634 = vrot.slane %v1632, 4
        %v1635 = vor.u32 %v1634, %v1630
        %v1636 = vrot.slane %v1635, 4
        %v1638 = vshll.u32 %v1608, 16
        %v1640 = vrot.slane %v1638, 5
        %v1641 = vsel %vm468, %v1636, %v1640
        %v1643 = vshrl.u32 %v1609, 16
        %v1645 = vrot.slane %v1643, 4
        %v1646 = vshll.u32 %v1609, 16
        %v1648 = vrot.slane %v1646, 5
        %v1649 = vor.u32 %v1645, %v1648
        %v1650 = vrot.slane %v1649, 4
        %v1652 = vshll.u32 %v1610, 16
        %v1654 = vrot.slane %v1652, 5
        %v1655 = vsel %vm468, %v1650, %v1654
        %v1656 = vshrl.u32 %v1610, 16
        %v1658 = vrot.slane %v1656, 4
        %v1659 = vor.u32 %v1658, %v1654
        %v1660 = vrot.slane %v1659, 4
        %v1662 = vshll.u32 %v1611, 16
        %v1664 = vrot.slane %v1662, 5
        %v1665 = vsel %vm468, %v1660, %v1664
        %v1667 = vshrl.u32 %v1612, 16
        %v1669 = vrot.slane %v1667, 4
        %v1670 = vshll.u32 %v1612, 16
        %v1672 = vrot.slane %v1670, 5
        %v1673 = vor.u32 %v1669, %v1672
        %v1674 = vrot.slane %v1673, 4
        %v1676 = vshll.u32 %v1613, 16
        %v1678 = vrot.slane %v1676, 5
        %v1679 = vsel %vm468, %v1674, %v1678
        %v1680 = vshrl.u32 %v1613, 16
        %v1682 = vrot.slane %v1680, 4
        %v1683 = vor.u32 %v1682, %v1678
        %v1684 = vrot.slane %v1683, 4
        %v1686 = vshll.u32 %v1614, 16
        %v1688 = vrot.slane %v1686, 5
        %v1689 = vsel %vm468, %v1684, %v1688
        %v1691 = vshrl.u32 %v1615, 16
        %v1693 = vrot.slane %v1691, 4
        %v1694 = vshll.u32 %v1615, 16
        %v1696 = vrot.slane %v1694, 5
        %v1697 = vor.u32 %v1693, %v1696
        %v1698 = vrot.slane %v1697, 4
        %v1700 = vshll.u32 %v1616, 16
        %v1702 = vrot.slane %v1700, 5
        %v1703 = vsel %vm468, %v1698, %v1702
        %v1704 = vshrl.u32 %v1616, 16
        %v1706 = vrot.slane %v1704, 4
        %v1707 = vor.u32 %v1706, %v1702
        %v1708 = vrot.slane %v1707, 4
        %v1710 = vshll.u32 %v1617, 16
        %v1712 = vrot.slane %v1710, 5
        %v1713 = vsel %vm468, %v1708, %v1712
        %s1714 = scalar_lea.vmem %s155, 16
        %v1715 = vld [vmem:[%s1714] sm:$0xf]
        %v1716 = vld [vmem:[%s1714 + $0x4] sm:$0xf]
        %v1717 = vld [vmem:[%s1714 + $0x8] sm:$0xf]
        %v1718 = vld [vmem:[%s1714 + $0xc] sm:$0xf]
        %v1719 = vunpack.c.l.b16 %v1631
        %v1720 = vunpack.c.l.b16 %v1641
        %v1721 = vunpack.c.l.b16 %v1655
        %v1722 = vunpack.c.l.b16 %v1665
        %v1723 = vunpack.c.l.b16 %v1679
        %v1724 = vunpack.c.l.b16 %v1689
        %v1725 = vunpack.c.l.b16 %v1703
        %v1726 = vunpack.c.l.b16 %v1713
        %v1727 = vpack.c.b16 %v1720, %v1719
        %v1728 = vpack.c.b16 %v1722, %v1721
        %v1729 = vpack.c.b16 %v1724, %v1723
        %v1730 = vpack.c.b16 %v1726, %v1725
        %v1735 = vunpack.c.l.b16 %v1715
        %v1736 = vunpack.c.l.b16 %v1716
        %v1737 = vunpack.c.l.b16 %v1717
        %v1738 = vunpack.c.l.b16 %v1718
        %v1739 = vpack.c.b16 %v1736, %v1735
        %v1740 = vpack.c.b16 %v1738, %v1737
        %v1744 = vsel %vm594, %v1727, 0
        %v1747 = vsel %vm594, %v1728, 0
        %v1750 = vsel %vm594, %v1729, 0
        %v1753 = vsel %vm594, %v1730, 0
        %1755 = vmatpush.bf16.msra.mxu0 0
        %1756 = vmatpush.bf16.msra.mxu0 0
        %1757 = vmatpush.bf16.msra.mxu0 0
        %1758 = vmatpush.bf16.msra.mxu0 0
        %1759 = vmatpush.bf16.msra.mxu0 0
        %1760 = vmatpush.bf16.msra.mxu0 0
        %1761 = vmatpush.bf16.msra.mxu0 %v1740
        %1762 = vmatpush.bf16.msra.mxu0 %v1739
        %1763 = vmatmul.bf16.gmra.mxu0 %v1744
        %v1764 = vpop.f32.mrf.mxu0
        %v1765 = vadd.f32 0.0, %v1764
        %v1766 = vpop.f32.mrf.mxu0
        %v1767 = vadd.f32 0.0, %v1766
        %1768 = vmatmul.bf16.gmra.mxu0 %v1747
        %v1769 = vpop.f32.mrf.mxu0
        %v1770 = vadd.f32 0.0, %v1769
        %v1771 = vpop.f32.mrf.mxu0
        %v1772 = vadd.f32 0.0, %v1771
        %1773 = vmatmul.bf16.gmra.mxu0 %v1750
        %v1774 = vpop.f32.mrf.mxu0
        %v1775 = vadd.f32 0.0, %v1774
        %v1776 = vpop.f32.mrf.mxu0
        %v1777 = vadd.f32 0.0, %v1776
        %1778 = vmatmul.bf16.gmra.mxu0 %v1753
        %v1779 = vpop.f32.mrf.mxu0
        %v1780 = vadd.f32 0.0, %v1779
        %v1781 = vpop.f32.mrf.mxu0
        %v1782 = vadd.f32 0.0, %v1781
        %1783 = vdwg.mxu0
        %v1784 = vadd.f32 %v1598, %v1765
        %v1785 = vadd.f32 %v1599, %v1767
        %v1786 = vadd.f32 %v1600, %v1770
        %v1787 = vadd.f32 %v1601, %v1772
        %v1788 = vadd.f32 %v1602, %v1775
        %v1789 = vadd.f32 %v1603, %v1777
        %v1790 = vadd.f32 %v1604, %v1780
        %v1791 = vadd.f32 %v1605, %v1782
        %s1792 = scalar_lea.vmem %s155, 32
        %v1793 = vld [vmem:[%s1792] sm:$0xf]
        %v1794 = vld [vmem:[%s1792 + $0x4] sm:$0xf]
        %v1795 = vld [vmem:[%s1792 + $0x8] sm:$0xf]
        %v1796 = vld [vmem:[%s1792 + $0xc] sm:$0xf]
        %v1801 = vunpack.c.l.b16 %v1793
        %v1802 = vunpack.c.l.b16 %v1794
        %v1803 = vunpack.c.l.b16 %v1795
        %v1804 = vunpack.c.l.b16 %v1796
        %v1805 = vpack.c.b16 %v1802, %v1801
        %v1806 = vpack.c.b16 %v1804, %v1803
        %1809 = vmatpush.bf16.msra.mxu0 0
        %1810 = vmatpush.bf16.msra.mxu0 0
        %1811 = vmatpush.bf16.msra.mxu0 0
        %1812 = vmatpush.bf16.msra.mxu0 0
        %1813 = vmatpush.bf16.msra.mxu0 0
        %1814 = vmatpush.bf16.msra.mxu0 0
        %1815 = vmatpush.bf16.msra.mxu0 %v1806
        %1816 = vmatpush.bf16.msra.mxu0 %v1805
        %1817 = vmatmul.bf16.gmra.mxu0 %v1744
        %v1818 = vpop.f32.mrf.mxu0
        %v1819 = vadd.f32 0.0, %v1818
        %v1820 = vpop.f32.mrf.mxu0
        %v1821 = vadd.f32 0.0, %v1820
        %1822 = vmatmul.bf16.gmra.mxu0 %v1747
        %v1823 = vpop.f32.mrf.mxu0
        %v1824 = vadd.f32 0.0, %v1823
        %v1825 = vpop.f32.mrf.mxu0
        %v1826 = vadd.f32 0.0, %v1825
        %1827 = vmatmul.bf16.gmra.mxu0 %v1750
        %v1828 = vpop.f32.mrf.mxu0
        %v1829 = vadd.f32 0.0, %v1828
        %v1830 = vpop.f32.mrf.mxu0
        %v1831 = vadd.f32 0.0, %v1830
        %1832 = vmatmul.bf16.gmra.mxu0 %v1753
        %v1833 = vpop.f32.mrf.mxu0
        %v1834 = vadd.f32 0.0, %v1833
        %v1835 = vpop.f32.mrf.mxu0
        %v1836 = vadd.f32 0.0, %v1835
        %1837 = vdwg.mxu0
        %v1838 = vadd.f32 %v1489, %v1819
        %v1839 = vadd.f32 %v1491, %v1821
        %v1840 = vadd.f32 %v1494, %v1824
        %v1841 = vadd.f32 %v1496, %v1826
        %v1842 = vadd.f32 %v1499, %v1829
        %v1843 = vadd.f32 %v1501, %v1831
        %v1844 = vadd.f32 %v1504, %v1834
        %v1845 = vadd.f32 %v1506, %v1836
        %v1846 = vld [vmem:[%s1511] sm:$0xe]
        %v1847 = vld [vmem:[%s1511 + $0xc] sm:$0xe]
        %v1848 = vld [vmem:[%s1511 + $0x18] sm:$0xe]
        %v1849 = vld [vmem:[%s1511 + $0x24] sm:$0xe]
        %v1862 = vrot.slane %v1846, 5
        %v1863 = vrot.slane %v1862, 4
        %v1864 = vrot.slane %v1607, 5
        %v1865 = vsel %vm728, %v1863, %v1864
        %v1866 = vrot.slane %v1864, 4
        %v1867 = vrot.slane %v1608, 5
        %v1868 = vsel %vm728, %v1866, %v1867
        %v1869 = vrot.slane %v1847, 5
        %v1870 = vrot.slane %v1869, 4
        %v1871 = vrot.slane %v1610, 5
        %v1872 = vsel %vm728, %v1870, %v1871
        %v1873 = vrot.slane %v1871, 4
        %v1874 = vrot.slane %v1611, 5
        %v1875 = vsel %vm728, %v1873, %v1874
        %v1876 = vrot.slane %v1848, 5
        %v1877 = vrot.slane %v1876, 4
        %v1878 = vrot.slane %v1613, 5
        %v1879 = vsel %vm728, %v1877, %v1878
        %v1880 = vrot.slane %v1878, 4
        %v1881 = vrot.slane %v1614, 5
        %v1882 = vsel %vm728, %v1880, %v1881
        %v1883 = vrot.slane %v1849, 5
        %v1884 = vrot.slane %v1883, 4
        %v1885 = vrot.slane %v1616, 5
        %v1886 = vsel %vm728, %v1884, %v1885
        %v1887 = vrot.slane %v1885, 4
        %v1888 = vrot.slane %v1617, 5
        %v1889 = vsel %vm728, %v1887, %v1888
        %v1890 = vld [vmem:[%s155] sm:$0xf]
        %v1891 = vld [vmem:[%s155 + $0x4] sm:$0xf]
        %v1892 = vld [vmem:[%s155 + $0x8] sm:$0xf]
        %v1893 = vld [vmem:[%s155 + $0xc] sm:$0xf]
        %v1894 = vunpack.c.l.b16 %v1865
        %v1895 = vunpack.c.l.b16 %v1868
        %v1896 = vunpack.c.l.b16 %v1872
        %v1897 = vunpack.c.l.b16 %v1875
        %v1898 = vunpack.c.l.b16 %v1879
        %v1899 = vunpack.c.l.b16 %v1882
        %v1900 = vunpack.c.l.b16 %v1886
        %v1901 = vunpack.c.l.b16 %v1889
        %v1902 = vpack.c.b16 %v1895, %v1894
        %v1903 = vpack.c.b16 %v1897, %v1896
        %v1904 = vpack.c.b16 %v1899, %v1898
        %v1905 = vpack.c.b16 %v1901, %v1900
        %v1910 = vunpack.c.l.b16 %v1890
        %v1911 = vunpack.c.l.b16 %v1891
        %v1912 = vunpack.c.l.b16 %v1892
        %v1913 = vunpack.c.l.b16 %v1893
        %v1914 = vpack.c.b16 %v1911, %v1910
        %v1915 = vpack.c.b16 %v1913, %v1912
        %v1919 = vsel %vm594, %v1902, 0
        %v1922 = vsel %vm594, %v1903, 0
        %v1925 = vsel %vm594, %v1904, 0
        %v1928 = vsel %vm594, %v1905, 0
        %1930 = vmatpush.bf16.msra.mxu0 0
        %1931 = vmatpush.bf16.msra.mxu0 0
        %1932 = vmatpush.bf16.msra.mxu0 0
        %1933 = vmatpush.bf16.msra.mxu0 0
        %1934 = vmatpush.bf16.msra.mxu0 0
        %1935 = vmatpush.bf16.msra.mxu0 0
        %1936 = vmatpush.bf16.msra.mxu0 %v1915
        %1937 = vmatpush.bf16.msra.mxu0 %v1914
        %1938 = vmatmul.bf16.gmra.mxu0 %v1919
        %v1939 = vpop.f32.mrf.mxu0
        %v1940 = vadd.f32 0.0, %v1939
        %v1941 = vpop.f32.mrf.mxu0
        %v1942 = vadd.f32 0.0, %v1941
        %1943 = vmatmul.bf16.gmra.mxu0 %v1922
        %v1944 = vpop.f32.mrf.mxu0
        %v1945 = vadd.f32 0.0, %v1944
        %v1946 = vpop.f32.mrf.mxu0
        %v1947 = vadd.f32 0.0, %v1946
        %1948 = vmatmul.bf16.gmra.mxu0 %v1925
        %v1949 = vpop.f32.mrf.mxu0
        %v1950 = vadd.f32 0.0, %v1949
        %v1951 = vpop.f32.mrf.mxu0
        %v1952 = vadd.f32 0.0, %v1951
        %1953 = vmatmul.bf16.gmra.mxu0 %v1928
        %v1954 = vpop.f32.mrf.mxu0
        %v1955 = vadd.f32 0.0, %v1954
        %v1956 = vpop.f32.mrf.mxu0
        %v1957 = vadd.f32 0.0, %v1956
        %1958 = vdwg.mxu0
        %v1959 = vadd.f32 %v1838, %v1940
        %v1960 = vadd.f32 %v1839, %v1942
        %v1961 = vadd.f32 %v1840, %v1945
        %v1962 = vadd.f32 %v1841, %v1947
        %v1963 = vadd.f32 %v1842, %v1950
        %v1964 = vadd.f32 %v1843, %v1952
        %v1965 = vadd.f32 %v1844, %v1955
        %v1966 = vadd.f32 %v1845, %v1957
        %vm1967 = vcmask 130048
        %1968 = vst.msk [vmem:[%s150] sm:$0xff] %vm1967, %v1145
        %1969 = vst.msk [vmem:[%s150 + $0x8] sm:$0xff] %vm1967, %v1146
        %1970 = vst.msk [vmem:[%s150 + $0x10] sm:$0xff] %vm1967, %v1147
        %1971 = vst.msk [vmem:[%s150 + $0x18] sm:$0xff] %vm1967, %v1148
        %1972 = vst.msk [vmem:[%s150 + $0x20] sm:$0xff] %vm1967, %v1149
        %1973 = vst.msk [vmem:[%s150 + $0x28] sm:$0xff] %vm1967, %v1150
        %1974 = vst.msk [vmem:[%s150 + $0x30] sm:$0xff] %vm1967, %v1151
        %1975 = vst.msk [vmem:[%s150 + $0x38] sm:$0xff] %vm1967, %v1152
        %s1976 = scalar_lea.vmem %s150, 64 [#allocation3]
        %1977 = vst.msk [vmem:[%s1976] sm:$0xff] %vm1967, %v1413
        %1978 = vst.msk [vmem:[%s1976 + $0x8] sm:$0xff] %vm1967, %v1414
        %1979 = vst.msk [vmem:[%s1976 + $0x10] sm:$0xff] %vm1967, %v1415
        %1980 = vst.msk [vmem:[%s1976 + $0x18] sm:$0xff] %vm1967, %v1416
        %1981 = vst.msk [vmem:[%s1976 + $0x20] sm:$0xff] %vm1967, %v1417
        %1982 = vst.msk [vmem:[%s1976 + $0x28] sm:$0xff] %vm1967, %v1418
        %1983 = vst.msk [vmem:[%s1976 + $0x30] sm:$0xff] %vm1967, %v1419
        %1984 = vst.msk [vmem:[%s1976 + $0x38] sm:$0xff] %vm1967, %v1420
        %s1985 = scalar_lea.vmem %s150, 128 [#allocation3]
        %1986 = vst.msk [vmem:[%s1985] sm:$0xff] %vm1967, %v1784
        %1987 = vst.msk [vmem:[%s1985 + $0x8] sm:$0xff] %vm1967, %v1785
        %1988 = vst.msk [vmem:[%s1985 + $0x10] sm:$0xff] %vm1967, %v1786
        %1989 = vst.msk [vmem:[%s1985 + $0x18] sm:$0xff] %vm1967, %v1787
        %1990 = vst.msk [vmem:[%s1985 + $0x20] sm:$0xff] %vm1967, %v1788
        %1991 = vst.msk [vmem:[%s1985 + $0x28] sm:$0xff] %vm1967, %v1789
        %1992 = vst.msk [vmem:[%s1985 + $0x30] sm:$0xff] %vm1967, %v1790
        %1993 = vst.msk [vmem:[%s1985 + $0x38] sm:$0xff] %vm1967, %v1791
        %s1994 = scalar_lea.vmem %s150, 192 [#allocation3]
        %1995 = vst.msk [vmem:[%s1994] sm:$0xff] %vm1967, %v1959
        %1996 = vst.msk [vmem:[%s1994 + $0x8] sm:$0xff] %vm1967, %v1960
        %1997 = vst.msk [vmem:[%s1994 + $0x10] sm:$0xff] %vm1967, %v1961
        %1998 = vst.msk [vmem:[%s1994 + $0x18] sm:$0xff] %vm1967, %v1962
        %1999 = vst.msk [vmem:[%s1994 + $0x20] sm:$0xff] %vm1967, %v1963
        %2000 = vst.msk [vmem:[%s1994 + $0x28] sm:$0xff] %vm1967, %v1964
        %2001 = vst.msk [vmem:[%s1994 + $0x30] sm:$0xff] %vm1967, %v1965
        %2002 = vst.msk [vmem:[%s1994 + $0x38] sm:$0xff] %vm1967, %v1966
        %s2003 = sand.u32 %s85, 1
        %s2004 = scalar_lea.sflag [#allocation4], %s2003
        %s2005 = sand.u32 %s85, 1
        %s2006 = smul.addr %s2005, 256
        %s2007 = scalar_lea.vmem [#allocation3], %s2006
        // Predicated region
        $region45: #{tpu_custom_call.1} parent=27 // pred_check
          %p2008 = pneg %p95
        $region46: #{tpu_custom_call.1} parent=27 // pred_check_branch
          %2010 = sbr.rel (%p2008) target = $region48
        $region47: #{tpu_custom_call.1} parent=27 // pred_region
          #allocation6 [shape = 'u32[6]{0}', space=smem, size = 0x18, scoped, tag = 'DMA stride descriptor']
          %s2011 = smul.u32 4, %s21
          %2013 = vsyncadd %s2004, 0
          %s2014 = smul.addr %s2011, 2
          %s2015 = sadd.s32 %s20, %s2014
          %s2016 = smul.addr %s2015, 8
          %s2017 = scalar_lea.hbm %s2, %s2016
          %s2019 = sshll.u32 1, 14
          %s2020 = sxor.u32 4294967295, %s2019
          %s2023 = sshll.u32 7, 18
          %s2024 = sxor.u32 4294967295, %s2023
          %s2025 = sand.u32 0, %s2024
          %s2027 = sor.u32 %s2025, 0
          %s2028 = sshll.u32 %s2007, 4
          %s2029 = int_to_ptr.vmem [resolvable:$true] %s2028
          %s2030 = sshll.u32 %s2017, 4
          %s2031 = int_to_ptr.hbm [resolvable:$true] %s2030
          %2037 = sst [smem:[#allocation6]] 1024
          %s2038 = scalar_lea.smem [#allocation6], 1
          %2039 = sst [smem:[%s2038]] 4096
          %s2040 = scalar_lea.smem [#allocation6], 2
          %2041 = sst [smem:[%s2040]] 8
          %s2042 = scalar_lea.smem [#allocation6], 3
          %2043 = sst [smem:[%s2042]] 128
          %s2044 = scalar_lea.smem [#allocation6], 4
          %2045 = sst [smem:[%s2044]] 128
          %s2046 = scalar_lea.smem [#allocation6], 5
          %2047 = sst [smem:[%s2046]] 8
          %2049 = dma.general %s2029, 4096, %s2031, %s2004, [#allocation5], [#allocation6], %s2027, 0
        $region48: #{tpu_custom_call.1} parent=27 // pred_fallthru
          _
      $region28: #{tpu_custom_call.1} parent=5 // pred_fallthru
        _
      %p2050 = scmp.le.s32.totalorder 2, %s11
      // Predicated region
      $region49: #{tpu_custom_call.1} parent=5 // pred_check
        %p2051 = pneg %p2050
      $region50: #{tpu_custom_call.1} parent=5 // pred_check_branch
        %2053 = sbr.rel (%p2051) target = $region52
      $region51: #{tpu_custom_call.1} parent=5 // pred_region
        %s2054 = ssub.s32 %s11, 2
        // Predicated region
        $region53: #{tpu_custom_call.1} parent=51 // pred_check
          %p2055 = pneg %p101
        $region54: #{tpu_custom_call.1} parent=51 // pred_check_branch
          %2057 = sbr.rel (%p2055) target = $region56
        $region55: #{tpu_custom_call.1} parent=51 // pred_region
          %s2058 = sand.u32 %s86, 1
          %s2059 = scalar_lea.sflag [#allocation4], %s2058
          %s2060 = sand.u32 %s86, 1
          %s2061 = smul.addr %s2060, 256
          %s2062 = scalar_lea.vmem [#allocation3], %s2061
          %2064 = dma.done %s2059, 4096
        $region56: #{tpu_custom_call.1} parent=51 // pred_fallthru
          _
      $region52: #{tpu_custom_call.1} parent=5 // pred_fallthru
        _
    $region6: #{tpu_custom_call.1} parent=1 // loop_footer
      %s15 = sadd.s32 1, %s11
    $region7: #{tpu_custom_call.1} parent=1 // loop_footer_branch
      %10 = sbr.rel target = $region3
    $region8: #{tpu_custom_call.1} parent=1 // loop_exit
      _
    %2065 = vsyncpa [#allocation4], 1
    %s2066 = scalar_lea.sflag [#allocation4], 1
    %2067 = vsyncpa %s2066, 1

</llo_original>
